<compile_context>
chip_gen: v6e
topology: v6e:2x2x1
jax: 0.10.0
libtpu: 0.0.40
codegen_flags: <defaults>
</compile_context>

<pallas_src>
import functools

import jax
import jax.numpy as jnp
from jax.experimental import pallas as pl
from jax.experimental.pallas import tpu as pltpu


def _round_up(x, m):
    return ((x + m - 1) // m) * m


# ---------------------------------------------------------------------------
# Fused kernel: LSTM recurrence + per-step ReLU(l2) + tanh(l3) * max_action.
#
# x_ref:    (T*B, S)   time-major flattened input (row = t*B + b)
# wih_ref:  (S, 4H)    input->gates weight (transposed PyTorch weight_ih)
# whh_ref:  (H, 4H)    hidden->gates weight (transposed PyTorch weight_hh)
# b_ref:    (1, 4H)    bias_ih + bias_hh (folded)
# h0_ref:   (B, H)     initial hidden       c0_ref: (B, H) initial cell
# w2_ref:   (H, H)     b2_ref: (1, H)
# w3_ref:   (H, Ap)    b3_ref: (1, Ap)      (action dim padded to 128 lanes)
# out_ref:  (T*B, Ap)  time-major action output (lane-dense stores)
# hN_ref:   (B, H)     final hidden         cN_ref: (B, H) final cell
# gates_ref:(T*B, 4H)  VMEM scratch for the hoisted input projection
#
# Gate order follows PyTorch: i, f, g, o.
# ---------------------------------------------------------------------------
def _actor_kernel(x_ref, wih_ref, whh_ref, b_ref, h0_ref, c0_ref,
                  w2_ref, b2_ref, w3_ref, b3_ref,
                  out_ref, hN_ref, cN_ref, gates_ref,
                  *, seq_len, max_action, io_matmul_dtype, recur_matmul_dtype,
                  full_unroll_limit):
    B, H = h0_ref.shape
    Ap = out_ref.shape[1]
    T = seq_len

    # ---- weights cast ONCE, hoisted out of the recurrence (no per-step
    # converts on the serial chain); biases broadcast once as well. ----
    wih = wih_ref[...].astype(io_matmul_dtype)
    whh = whh_ref[...].astype(recur_matmul_dtype)
    w2 = w2_ref[...].astype(io_matmul_dtype)
    w3 = w3_ref[...].astype(io_matmul_dtype)
    b2 = jnp.broadcast_to(b2_ref[...], (B, H))
    b3 = jnp.broadcast_to(b3_ref[...], (B, Ap))

    # ---- hoisted input projection: one (T*B,S)@(S,4H) MXU matmul, off the
    # serial h-dependency chain.  Spilled to VMEM scratch so only (B,4H)
    # stays live per step (scales with T*B without going spill-bound). ----
    gates_ref[...] = (jnp.dot(x_ref[...].astype(io_matmul_dtype), wih,
                              preferred_element_type=jnp.float32)
                      + b_ref[...])

    def step(t, h, c):
        r0 = t * B
        if not isinstance(r0, int):
            r0 = pl.multiple_of(r0, B)          # aligned dynamic slice (fori path)
        gates = gates_ref[pl.ds(r0, B), :] + jnp.dot(
            h.astype(recur_matmul_dtype), whh,
            preferred_element_type=jnp.float32)                     # (B, 4H)
        # Full-width activations (f32 VPU/EUP, v5e-safe): 2 launches not 4.
        sg = jax.nn.sigmoid(gates)
        tg = jnp.tanh(gates)
        i_g = sg[:, 0 * H:1 * H]
        f_g = sg[:, 1 * H:2 * H]
        g_g = tg[:, 2 * H:3 * H]
        o_g = sg[:, 3 * H:4 * H]
        c = f_g * c + i_g * g_g
        h = o_g * jnp.tanh(c)
        # ---- fused per-step MLP head: independent of the next recurrent
        # step, so it fills MXU bubbles on the serial chain. ----
        z = jnp.maximum(jnp.dot(h.astype(io_matmul_dtype), w2,
                                preferred_element_type=jnp.float32) + b2, 0.0)
        y = jnp.dot(z.astype(io_matmul_dtype), w3,
                    preferred_element_type=jnp.float32) + b3
        out_ref[pl.ds(r0, B), :] = (max_action * jnp.tanh(y)).astype(out_ref.dtype)
        return h, c

    h = h0_ref[...]
    c = c0_ref[...]
    if T <= full_unroll_limit:
        # Full static unroll: static slices, scheduler sees across steps.
        for t in range(T):
            h, c = step(t, h, c)
    else:
        # Large T: bounded live ranges / code size, modest unroll for LLO.
        h, c = jax.lax.fori_loop(0, T, lambda t, hc: step(t, hc[0], hc[1]),
                                 (h, c), unroll=4)

    hN_ref[...] = h
    cN_ref[...] = c


_VMEM_SPEC = pl.BlockSpec(memory_space=pltpu.MemorySpace.VMEM)


def actor_forward(params, state, hidden, *, max_action,
                  io_matmul_dtype=jnp.float32,
                  recur_matmul_dtype=jnp.float32,
                  full_unroll_limit=32):
    """Pallas implementation of Actor.forward (recurrent branch).

    state:  (B, T, S) float32   (batch_first, PyTorch convention)
    hidden: tuple (h0, c0), each (1, B, H) float32
    returns (max_action * tanh(l3(relu(l2(lstm_out)))),  (hN, cN))

    io_matmul_dtype controls the hoisted input projection and the MLP head
    (bf16 gives ~2-3x MXU throughput on v6e/v7x); recur_matmul_dtype controls
    the serial h@Whh matmul (keep f32 for tight numerics).
    """
    B, T, S = state.shape
    h0, c0 = hidden
    H = h0.shape[-1]
    A = params["w3"].shape[1]

    B_pad = _round_up(B, 8)        # sublane width
    A_pad = _round_up(A, 128)      # lane width -> lane-dense output stores

    # Pad batch with zeros (padded rows evolve under bias-only gates; they are
    # sliced off below and must never be read as valid hN/cN rows).
    if B_pad != B:
        state_p = jnp.pad(state, ((0, B_pad - B), (0, 0), (0, 0)))
        h0_p = jnp.pad(h0[0], ((0, B_pad - B), (0, 0)))
        c0_p = jnp.pad(c0[0], ((0, B_pad - B), (0, 0)))
    else:
        state_p, h0_p, c0_p = state, h0[0], c0[0]

    # Pad the l3 output columns with zeros so the kernel's stores are lane-dense.
    w3_p, b3_p = params["w3"], params["b3"]
    if A_pad != A:
        w3_p = jnp.pad(w3_p, ((0, 0), (0, A_pad - A)))
        b3_p = jnp.pad(b3_p, ((0, 0), (0, A_pad - A)))

    # Time-major flattened input (row = t*B + b).
    x_tm = jnp.transpose(state_p, (1, 0, 2)).reshape(T * B_pad, S)

    N = T * B_pad
    G = 4 * H
    flops = (2 * N * S * G            # hoisted input projection
             + T * 2 * B_pad * H * G  # recurrent matmuls
             + 2 * N * H * H          # l2
             + 2 * N * H * A_pad)     # l3
    transcendentals = T * B_pad * (2 * G + H) + N * A_pad
    bytes_accessed = 4 * (N * S + S * G + H * G + G + 6 * B_pad * H
                          + H * H + H + H * A_pad + A_pad + N * A_pad)

    # VMEM budget: inputs/outputs + the (N,4H) gates scratch; cap at 48 MiB so
    # the no-grid whole-array design stays inside v7x's 64 MiB VMEM.
    vmem_bytes = bytes_accessed + 4 * N * G
    vmem_limit = int(min(max(2 * vmem_bytes, 32 * 1024 * 1024),
                         48 * 1024 * 1024))

    kernel = functools.partial(_actor_kernel, seq_len=T,
                               max_action=float(max_action),
                               io_matmul_dtype=io_matmul_dtype,
                               recur_matmul_dtype=recur_matmul_dtype,
                               full_unroll_limit=full_unroll_limit)

    out_tm, h_n, c_n = pl.pallas_call(
        kernel,
        out_shape=(
            jax.ShapeDtypeStruct((N, A_pad), jnp.float32),
            jax.ShapeDtypeStruct((B_pad, H), jnp.float32),
            jax.ShapeDtypeStruct((B_pad, H), jnp.float32),
        ),
        in_specs=[_VMEM_SPEC] * 10,
        out_specs=(_VMEM_SPEC, _VMEM_SPEC, _VMEM_SPEC),
        scratch_shapes=[pltpu.VMEM((N, G), jnp.float32)],
        compiler_params=pltpu.CompilerParams(vmem_limit_bytes=vmem_limit),
        cost_estimate=pl.CostEstimate(flops=flops,
                                      transcendentals=transcendentals,
                                      bytes_accessed=bytes_accessed),
    )(x_tm, params["w_ih"], params["w_hh"], params["b_lstm"], h0_p, c0_p,
      params["w2"], params["b2"], w3_p, b3_p)

    # Back to batch_first and strip padding (single fused XLA transpose+slice).
    action = jnp.transpose(out_tm.reshape(T, B_pad, A_pad), (1, 0, 2))[:B, :, :A]
    return action, (h_n[:B][None], c_n[:B][None])


# ---------------------------------------------------------------------------
# Pure-JAX reference (mirrors the PyTorch semantics) for a sanity check.
# ---------------------------------------------------------------------------
def actor_forward_ref(params, state, hidden, *, max_action):
    B, T, S = state.shape
    h = hidden[0][0]
    c = hidden[1][0]
    H = h.shape[-1]
    outs = []
    for t in range(T):
        g = state[:, t, :] @ params["w_ih"] + h @ params["w_hh"] + params["b_lstm"]
        i = jax.nn.sigmoid(g[:, 0 * H:1 * H])
        f = jax.nn.sigmoid(g[:, 1 * H:2 * H])
        gg = jnp.tanh(g[:, 2 * H:3 * H])
        o = jax.nn.sigmoid(g[:, 3 * H:4 * H])
        c = f * c + i * gg
        h = o * jnp.tanh(c)
        outs.append(h)
    a = jnp.stack(outs, axis=1)
    a = jax.nn.relu(a @ params["w2"] + params["b2"][0])
    a = jnp.tanh(a @ params["w3"] + params["b3"][0])
    return max_action * a, (h[None], c[None])


def init_params(key, state_dim, hidden_dim, action_dim):
    ks = jax.random.split(key, 8)
    u = lambda k, shape, s: jax.random.uniform(k, shape, jnp.float32, -s, s)
    bound = 1.0 / jnp.sqrt(hidden_dim)
    return {
        # LSTM params, stored transposed: (in_features, 4*hidden)
        "w_ih": u(ks[0], (state_dim, 4 * hidden_dim), bound),
        "w_hh": u(ks[1], (hidden_dim, 4 * hidden_dim), bound),
        "b_lstm": u(ks[2], (1, 4 * hidden_dim), bound),   # b_ih + b_hh folded
        # l2
        "w2": u(ks[3], (hidden_dim, hidden_dim), bound),
        "b2": u(ks[4], (1, hidden_dim), bound),
        # l3
        "w3": u(ks[5], (hidden_dim, action_dim), bound),
        "b3": u(ks[6], (1, action_dim), bound),
    }


if __name__ == "__main__":
    B, T, S, H, A = 2, 8, 8, 32, 4
    MAX_ACTION = 2.0

    key = jax.random.PRNGKey(0)
    kp, kx, kh, kc = jax.random.split(key, 4)

    params = init_params(kp, S, H, A)
    state = jax.random.normal(kx, (B, T, S), jnp.float32)
    h0 = jax.random.normal(kh, (1, B, H), jnp.float32)
    c0 = jax.random.normal(kc, (1, B, H), jnp.float32)

    # f32 everywhere so the tight reference check is meaningful.
    fwd = jax.jit(functools.partial(actor_forward, max_action=MAX_ACTION))
    action, (h_n, c_n) = fwd(params, state, (h0, c0))
    jax.block_until_ready((action, h_n, c_n))

    ref_action, (ref_h, ref_c) = actor_forward_ref(
        params, state, (h0, c0), max_action=MAX_ACTION)
    assert action.shape == (B, T, A)
    assert h_n.shape == (1, B, H) and c_n.shape == (1, B, H)
    assert jnp.allclose(action, ref_action, atol=1e-5)
    assert jnp.allclose(h_n, ref_h, atol=1e-5)
    assert jnp.allclose(c_n, ref_c, atol=1e-5)

    # bf16 MXU operands for the hoisted projection + head (recurrence stays
    # f32): ~2-3x MXU throughput on v6e/v7x; loose tolerance since the bf16
    # projection feeds the recurrence and the error compounds over T.
    fwd_bf16 = jax.jit(functools.partial(actor_forward, max_action=MAX_ACTION,
                                         io_matmul_dtype=jnp.bfloat16))
    action_bf, _ = fwd_bf16(params, state, (h0, c0))
    jax.block_until_ready(action_bf)
    assert action_bf.shape == (B, T, A)
    assert jnp.allclose(action_bf, ref_action, atol=1e-1)

    print("KERNEL_OK")
</pallas_src>

<mosaic_0001>
module attributes {stable_mosaic.version = 11 : i64} {
  func.func @_actor_kernel(%arg0: memref<64x8xf32, #tpu.memory_space<vmem>>, %arg1: memref<8x128xf32, #tpu.memory_space<vmem>>, %arg2: memref<32x128xf32, #tpu.memory_space<vmem>>, %arg3: memref<1x128xf32, #tpu.memory_space<vmem>>, %arg4: memref<8x32xf32, #tpu.memory_space<vmem>>, %arg5: memref<8x32xf32, #tpu.memory_space<vmem>>, %arg6: memref<32x32xf32, #tpu.memory_space<vmem>>, %arg7: memref<1x32xf32, #tpu.memory_space<vmem>>, %arg8: memref<32x128xf32, #tpu.memory_space<vmem>>, %arg9: memref<1x128xf32, #tpu.memory_space<vmem>>, %arg10: memref<64x128xf32, #tpu.memory_space<vmem>>, %arg11: memref<8x32xf32, #tpu.memory_space<vmem>>, %arg12: memref<8x32xf32, #tpu.memory_space<vmem>>, %arg13: memref<64x128xf32, #tpu.memory_space<vmem>>) attributes {dimension_semantics = [], scalar_prefetch = 0 : i64, scratch_operands = 1 : i64, tpu.core_type = #tpu.core_type<tc>} {
    %c0 = arith.constant 0 : index
    %c0_0 = arith.constant 0 : index
    %0 = vector.load %arg1[%c0, %c0_0] : memref<8x128xf32, #tpu.memory_space<vmem>>, vector<8x128xf32>
    %c0_1 = arith.constant 0 : index
    %c0_2 = arith.constant 0 : index
    %1 = vector.load %arg2[%c0_1, %c0_2] : memref<32x128xf32, #tpu.memory_space<vmem>>, vector<32x128xf32>
    %c0_3 = arith.constant 0 : index
    %c0_4 = arith.constant 0 : index
    %2 = vector.load %arg6[%c0_3, %c0_4] : memref<32x32xf32, #tpu.memory_space<vmem>>, vector<32x32xf32>
    %c0_5 = arith.constant 0 : index
    %c0_6 = arith.constant 0 : index
    %3 = vector.load %arg8[%c0_5, %c0_6] : memref<32x128xf32, #tpu.memory_space<vmem>>, vector<32x128xf32>
    %c0_7 = arith.constant 0 : index
    %c0_8 = arith.constant 0 : index
    %4 = vector.load %arg7[%c0_7, %c0_8] : memref<1x32xf32, #tpu.memory_space<vmem>>, vector<1x32xf32>
    %5 = vector.shape_cast %4 : vector<1x32xf32> to vector<1x32xf32>
    %6 = vector.broadcast %5 : vector<1x32xf32> to vector<8x32xf32>
    %c0_9 = arith.constant 0 : index
    %c0_10 = arith.constant 0 : index
    %7 = vector.load %arg9[%c0_9, %c0_10] : memref<1x128xf32, #tpu.memory_space<vmem>>, vector<1x128xf32>
    %8 = vector.shape_cast %7 : vector<1x128xf32> to vector<1x128xf32>
    %9 = vector.broadcast %8 : vector<1x128xf32> to vector<8x128xf32>
    %c0_11 = arith.constant 0 : index
    %c0_12 = arith.constant 0 : index
    %10 = vector.load %arg0[%c0_11, %c0_12] : memref<64x8xf32, #tpu.memory_space<vmem>>, vector<64x8xf32>
    %cst = arith.constant dense<0.000000e+00> : vector<64x128xf32>
    %11 = tpu.matmul %10, %0, %cst {dimension_numbers = #tpu.dot_dimension_numbers<[1], [0], [0], [1], [0, 0, 1, 1], [], []>} : vector<64x8xf32>, vector<8x128xf32>, vector<64x128xf32> -> vector<64x128xf32>
    %c0_13 = arith.constant 0 : index
    %c0_14 = arith.constant 0 : index
    %12 = vector.load %arg3[%c0_13, %c0_14] : memref<1x128xf32, #tpu.memory_space<vmem>>, vector<1x128xf32>
    %13 = vector.broadcast %12 : vector<1x128xf32> to vector<64x128xf32>
    %14 = arith.addf %11, %13 : vector<64x128xf32>
    %c0_15 = arith.constant 0 : index
    %c0_16 = arith.constant 0 : index
    %15 = vector.load %arg13[%c0_15, %c0_16] : memref<64x128xf32, #tpu.memory_space<vmem>>, vector<64x128xf32>
    tpu.vector_store %arg13[%c0_15, %c0_16], %14 {strides = array<i32>} : memref<64x128xf32, #tpu.memory_space<vmem>>, vector<64x128xf32>,
    %c0_17 = arith.constant 0 : index
    %c0_18 = arith.constant 0 : index
    %16 = vector.load %arg4[%c0_17, %c0_18] : memref<8x32xf32, #tpu.memory_space<vmem>>, vector<8x32xf32>
    %c0_19 = arith.constant 0 : index
    %c0_20 = arith.constant 0 : index
    %17 = vector.load %arg5[%c0_19, %c0_20] : memref<8x32xf32, #tpu.memory_space<vmem>>, vector<8x32xf32>
    %c0_21 = arith.constant 0 : index
    %c0_22 = arith.constant 0 : index
    %18 = vector.load %arg13[%c0_21, %c0_22] : memref<64x128xf32, #tpu.memory_space<vmem>>, vector<8x128xf32>
    %cst_23 = arith.constant dense<0.000000e+00> : vector<8x128xf32>
    %19 = tpu.matmul %16, %1, %cst_23 {dimension_numbers = #tpu.dot_dimension_numbers<[1], [0], [0], [1], [0, 0, 1, 1], [], []>} : vector<8x32xf32>, vector<32x128xf32>, vector<8x128xf32> -> vector<8x128xf32>
    %20 = arith.addf %18, %19 : vector<8x128xf32>
    %21 = arith.negf %20 : vector<8x128xf32>
    %22 = math.exp %21 : vector<8x128xf32>
    %cst_24 = arith.constant 1.000000e+00 : f32
    %23 = vector.broadcast %cst_24 : f32 to vector<8x128xf32>
    %24 = arith.addf %23, %22 : vector<8x128xf32>
    %25 = arith.divf %23, %24 : vector<8x128xf32>
    %26 = math.tanh %20 : vector<8x128xf32>
    %27 = vector.extract_strided_slice %25 {offsets = [0, 0], sizes = [8, 32], strides = [1, 1]} : vector<8x128xf32> to vector<8x32xf32>
    %28 = vector.extract_strided_slice %25 {offsets = [0, 32], sizes = [8, 32], strides = [1, 1]} : vector<8x128xf32> to vector<8x32xf32>
    %29 = vector.extract_strided_slice %26 {offsets = [0, 64], sizes = [8, 32], strides = [1, 1]} : vector<8x128xf32> to vector<8x32xf32>
    %30 = vector.extract_strided_slice %25 {offsets = [0, 96], sizes = [8, 32], strides = [1, 1]} : vector<8x128xf32> to vector<8x32xf32>
    %31 = arith.mulf %28, %17 : vector<8x32xf32>
    %32 = arith.mulf %27, %29 : vector<8x32xf32>
    %33 = arith.addf %31, %32 : vector<8x32xf32>
    %34 = math.tanh %33 : vector<8x32xf32>
    %35 = arith.mulf %30, %34 : vector<8x32xf32>
    %cst_25 = arith.constant dense<0.000000e+00> : vector<8x32xf32>
    %36 = tpu.matmul %35, %2, %cst_25 {dimension_numbers = #tpu.dot_dimension_numbers<[1], [0], [0], [1], [0, 0, 1, 1], [], []>} : vector<8x32xf32>, vector<32x32xf32>, vector<8x32xf32> -> vector<8x32xf32>
    %37 = arith.addf %36, %6 : vector<8x32xf32>
    %cst_26 = arith.constant 0.000000e+00 : f32
    %38 = vector.broadcast %cst_26 : f32 to vector<8x32xf32>
    %39 = arith.maximumf %37, %38 : vector<8x32xf32>
    %cst_27 = arith.constant dense<0.000000e+00> : vector<8x128xf32>
    %40 = tpu.matmul %39, %3, %cst_27 {dimension_numbers = #tpu.dot_dimension_numbers<[1], [0], [0], [1], [0, 0, 1, 1], [], []>} : vector<8x32xf32>, vector<32x128xf32>, vector<8x128xf32> -> vector<8x128xf32>
    %41 = arith.addf %40, %9 : vector<8x128xf32>
    %42 = math.tanh %41 : vector<8x128xf32>
    %cst_28 = arith.constant 2.000000e+00 : f32
    %43 = vector.broadcast %cst_28 : f32 to vector<8x128xf32>
    %44 = arith.mulf %43, %42 : vector<8x128xf32>
    %c0_29 = arith.constant 0 : index
    %c0_30 = arith.constant 0 : index
    %45 = vector.load %arg10[%c0_29, %c0_30] : memref<64x128xf32, #tpu.memory_space<vmem>>, vector<8x128xf32>
    tpu.vector_store %arg10[%c0_29, %c0_30], %44 {strides = array<i32>} : memref<64x128xf32, #tpu.memory_space<vmem>>, vector<8x128xf32>,
    %c8 = arith.constant 8 : index
    %c0_31 = arith.constant 0 : index
    %46 = vector.load %arg13[%c8, %c0_31] : memref<64x128xf32, #tpu.memory_space<vmem>>, vector<8x128xf32>
    %cst_32 = arith.constant dense<0.000000e+00> : vector<8x128xf32>
    %47 = tpu.matmul %35, %1, %cst_32 {dimension_numbers = #tpu.dot_dimension_numbers<[1], [0], [0], [1], [0, 0, 1, 1], [], []>} : vector<8x32xf32>, vector<32x128xf32>, vector<8x128xf32> -> vector<8x128xf32>
    %48 = arith.addf %46, %47 : vector<8x128xf32>
    %49 = arith.negf %48 : vector<8x128xf32>
    %50 = math.exp %49 : vector<8x128xf32>
    %cst_33 = arith.constant 1.000000e+00 : f32
    %51 = vector.broadcast %cst_33 : f32 to vector<8x128xf32>
    %52 = arith.addf %51, %50 : vector<8x128xf32>
    %53 = arith.divf %51, %52 : vector<8x128xf32>
    %54 = math.tanh %48 : vector<8x128xf32>
    %55 = vector.extract_strided_slice %53 {offsets = [0, 0], sizes = [8, 32], strides = [1, 1]} : vector<8x128xf32> to vector<8x32xf32>
    %56 = vector.extract_strided_slice %53 {offsets = [0, 32], sizes = [8, 32], strides = [1, 1]} : vector<8x128xf32> to vector<8x32xf32>
    %57 = vector.extract_strided_slice %54 {offsets = [0, 64], sizes = [8, 32], strides = [1, 1]} : vector<8x128xf32> to vector<8x32xf32>
    %58 = vector.extract_strided_slice %53 {offsets = [0, 96], sizes = [8, 32], strides = [1, 1]} : vector<8x128xf32> to vector<8x32xf32>
    %59 = arith.mulf %56, %33 : vector<8x32xf32>
    %60 = arith.mulf %55, %57 : vector<8x32xf32>
    %61 = arith.addf %59, %60 : vector<8x32xf32>
    %62 = math.tanh %61 : vector<8x32xf32>
    %63 = arith.mulf %58, %62 : vector<8x32xf32>
    %cst_34 = arith.constant dense<0.000000e+00> : vector<8x32xf32>
    %64 = tpu.matmul %63, %2, %cst_34 {dimension_numbers = #tpu.dot_dimension_numbers<[1], [0], [0], [1], [0, 0, 1, 1], [], []>} : vector<8x32xf32>, vector<32x32xf32>, vector<8x32xf32> -> vector<8x32xf32>
    %65 = arith.addf %64, %6 : vector<8x32xf32>
    %cst_35 = arith.constant 0.000000e+00 : f32
    %66 = vector.broadcast %cst_35 : f32 to vector<8x32xf32>
    %67 = arith.maximumf %65, %66 : vector<8x32xf32>
    %cst_36 = arith.constant dense<0.000000e+00> : vector<8x128xf32>
    %68 = tpu.matmul %67, %3, %cst_36 {dimension_numbers = #tpu.dot_dimension_numbers<[1], [0], [0], [1], [0, 0, 1, 1], [], []>} : vector<8x32xf32>, vector<32x128xf32>, vector<8x128xf32> -> vector<8x128xf32>
    %69 = arith.addf %68, %9 : vector<8x128xf32>
    %70 = math.tanh %69 : vector<8x128xf32>
    %cst_37 = arith.constant 2.000000e+00 : f32
    %71 = vector.broadcast %cst_37 : f32 to vector<8x128xf32>
    %72 = arith.mulf %71, %70 : vector<8x128xf32>
    %c8_38 = arith.constant 8 : index
    %c0_39 = arith.constant 0 : index
    %73 = vector.load %arg10[%c8_38, %c0_39] : memref<64x128xf32, #tpu.memory_space<vmem>>, vector<8x128xf32>
    tpu.vector_store %arg10[%c8_38, %c0_39], %72 {strides = array<i32>} : memref<64x128xf32, #tpu.memory_space<vmem>>, vector<8x128xf32>,
    %c16 = arith.constant 16 : index
    %c0_40 = arith.constant 0 : index
    %74 = vector.load %arg13[%c16, %c0_40] : memref<64x128xf32, #tpu.memory_space<vmem>>, vector<8x128xf32>
    %cst_41 = arith.constant dense<0.000000e+00> : vector<8x128xf32>
    %75 = tpu.matmul %63, %1, %cst_41 {dimension_numbers = #tpu.dot_dimension_numbers<[1], [0], [0], [1], [0, 0, 1, 1], [], []>} : vector<8x32xf32>, vector<32x128xf32>, vector<8x128xf32> -> vector<8x128xf32>
    %76 = arith.addf %74, %75 : vector<8x128xf32>
    %77 = arith.negf %76 : vector<8x128xf32>
    %78 = math.exp %77 : vector<8x128xf32>
    %cst_42 = arith.constant 1.000000e+00 : f32
    %79 = vector.broadcast %cst_42 : f32 to vector<8x128xf32>
    %80 = arith.addf %79, %78 : vector<8x128xf32>
    %81 = arith.divf %79, %80 : vector<8x128xf32>
    %82 = math.tanh %76 : vector<8x128xf32>
    %83 = vector.extract_strided_slice %81 {offsets = [0, 0], sizes = [8, 32], strides = [1, 1]} : vector<8x128xf32> to vector<8x32xf32>
    %84 = vector.extract_strided_slice %81 {offsets = [0, 32], sizes = [8, 32], strides = [1, 1]} : vector<8x128xf32> to vector<8x32xf32>
    %85 = vector.extract_strided_slice %82 {offsets = [0, 64], sizes = [8, 32], strides = [1, 1]} : vector<8x128xf32> to vector<8x32xf32>
    %86 = vector.extract_strided_slice %81 {offsets = [0, 96], sizes = [8, 32], strides = [1, 1]} : vector<8x128xf32> to vector<8x32xf32>
    %87 = arith.mulf %84, %61 : vector<8x32xf32>
    %88 = arith.mulf %83, %85 : vector<8x32xf32>
    %89 = arith.addf %87, %88 : vector<8x32xf32>
    %90 = math.tanh %89 : vector<8x32xf32>
    %91 = arith.mulf %86, %90 : vector<8x32xf32>
    %cst_43 = arith.constant dense<0.000000e+00> : vector<8x32xf32>
    %92 = tpu.matmul %91, %2, %cst_43 {dimension_numbers = #tpu.dot_dimension_numbers<[1], [0], [0], [1], [0, 0, 1, 1], [], []>} : vector<8x32xf32>, vector<32x32xf32>, vector<8x32xf32> -> vector<8x32xf32>
    %93 = arith.addf %92, %6 : vector<8x32xf32>
    %cst_44 = arith.constant 0.000000e+00 : f32
    %94 = vector.broadcast %cst_44 : f32 to vector<8x32xf32>
    %95 = arith.maximumf %93, %94 : vector<8x32xf32>
    %cst_45 = arith.constant dense<0.000000e+00> : vector<8x128xf32>
    %96 = tpu.matmul %95, %3, %cst_45 {dimension_numbers = #tpu.dot_dimension_numbers<[1], [0], [0], [1], [0, 0, 1, 1], [], []>} : vector<8x32xf32>, vector<32x128xf32>, vector<8x128xf32> -> vector<8x128xf32>
    %97 = arith.addf %96, %9 : vector<8x128xf32>
    %98 = math.tanh %97 : vector<8x128xf32>
    %cst_46 = arith.constant 2.000000e+00 : f32
    %99 = vector.broadcast %cst_46 : f32 to vector<8x128xf32>
    %100 = arith.mulf %99, %98 : vector<8x128xf32>
    %c16_47 = arith.constant 16 : index
    %c0_48 = arith.constant 0 : index
    %101 = vector.load %arg10[%c16_47, %c0_48] : memref<64x128xf32, #tpu.memory_space<vmem>>, vector<8x128xf32>
    tpu.vector_store %arg10[%c16_47, %c0_48], %100 {strides = array<i32>} : memref<64x128xf32, #tpu.memory_space<vmem>>, vector<8x128xf32>,
    %c24 = arith.constant 24 : index
    %c0_49 = arith.constant 0 : index
    %102 = vector.load %arg13[%c24, %c0_49] : memref<64x128xf32, #tpu.memory_space<vmem>>, vector<8x128xf32>
    %cst_50 = arith.constant dense<0.000000e+00> : vector<8x128xf32>
    %103 = tpu.matmul %91, %1, %cst_50 {dimension_numbers = #tpu.dot_dimension_numbers<[1], [0], [0], [1], [0, 0, 1, 1], [], []>} : vector<8x32xf32>, vector<32x128xf32>, vector<8x128xf32> -> vector<8x128xf32>
    %104 = arith.addf %102, %103 : vector<8x128xf32>
    %105 = arith.negf %104 : vector<8x128xf32>
    %106 = math.exp %105 : vector<8x128xf32>
    %cst_51 = arith.constant 1.000000e+00 : f32
    %107 = vector.broadcast %cst_51 : f32 to vector<8x128xf32>
    %108 = arith.addf %107, %106 : vector<8x128xf32>
    %109 = arith.divf %107, %108 : vector<8x128xf32>
    %110 = math.tanh %104 : vector<8x128xf32>
    %111 = vector.extract_strided_slice %109 {offsets = [0, 0], sizes = [8, 32], strides = [1, 1]} : vector<8x128xf32> to vector<8x32xf32>
    %112 = vector.extract_strided_slice %109 {offsets = [0, 32], sizes = [8, 32], strides = [1, 1]} : vector<8x128xf32> to vector<8x32xf32>
    %113 = vector.extract_strided_slice %110 {offsets = [0, 64], sizes = [8, 32], strides = [1, 1]} : vector<8x128xf32> to vector<8x32xf32>
    %114 = vector.extract_strided_slice %109 {offsets = [0, 96], sizes = [8, 32], strides = [1, 1]} : vector<8x128xf32> to vector<8x32xf32>
    %115 = arith.mulf %112, %89 : vector<8x32xf32>
    %116 = arith.mulf %111, %113 : vector<8x32xf32>
    %117 = arith.addf %115, %116 : vector<8x32xf32>
    %118 = math.tanh %117 : vector<8x32xf32>
    %119 = arith.mulf %114, %118 : vector<8x32xf32>
    %cst_52 = arith.constant dense<0.000000e+00> : vector<8x32xf32>
    %120 = tpu.matmul %119, %2, %cst_52 {dimension_numbers = #tpu.dot_dimension_numbers<[1], [0], [0], [1], [0, 0, 1, 1], [], []>} : vector<8x32xf32>, vector<32x32xf32>, vector<8x32xf32> -> vector<8x32xf32>
    %121 = arith.addf %120, %6 : vector<8x32xf32>
    %cst_53 = arith.constant 0.000000e+00 : f32
    %122 = vector.broadcast %cst_53 : f32 to vector<8x32xf32>
    %123 = arith.maximumf %121, %122 : vector<8x32xf32>
    %cst_54 = arith.constant dense<0.000000e+00> : vector<8x128xf32>
    %124 = tpu.matmul %123, %3, %cst_54 {dimension_numbers = #tpu.dot_dimension_numbers<[1], [0], [0], [1], [0, 0, 1, 1], [], []>} : vector<8x32xf32>, vector<32x128xf32>, vector<8x128xf32> -> vector<8x128xf32>
    %125 = arith.addf %124, %9 : vector<8x128xf32>
    %126 = math.tanh %125 : vector<8x128xf32>
    %cst_55 = arith.constant 2.000000e+00 : f32
    %127 = vector.broadcast %cst_55 : f32 to vector<8x128xf32>
    %128 = arith.mulf %127, %126 : vector<8x128xf32>
    %c24_56 = arith.constant 24 : index
    %c0_57 = arith.constant 0 : index
    %129 = vector.load %arg10[%c24_56, %c0_57] : memref<64x128xf32, #tpu.memory_space<vmem>>, vector<8x128xf32>
    tpu.vector_store %arg10[%c24_56, %c0_57], %128 {strides = array<i32>} : memref<64x128xf32, #tpu.memory_space<vmem>>, vector<8x128xf32>,
    %c32 = arith.constant 32 : index
    %c0_58 = arith.constant 0 : index
    %130 = vector.load %arg13[%c32, %c0_58] : memref<64x128xf32, #tpu.memory_space<vmem>>, vector<8x128xf32>
    %cst_59 = arith.constant dense<0.000000e+00> : vector<8x128xf32>
    %131 = tpu.matmul %119, %1, %cst_59 {dimension_numbers = #tpu.dot_dimension_numbers<[1], [0], [0], [1], [0, 0, 1, 1], [], []>} : vector<8x32xf32>, vector<32x128xf32>, vector<8x128xf32> -> vector<8x128xf32>
    %132 = arith.addf %130, %131 : vector<8x128xf32>
    %133 = arith.negf %132 : vector<8x128xf32>
    %134 = math.exp %133 : vector<8x128xf32>
    %cst_60 = arith.constant 1.000000e+00 : f32
    %135 = vector.broadcast %cst_60 : f32 to vector<8x128xf32>
    %136 = arith.addf %135, %134 : vector<8x128xf32>
    %137 = arith.divf %135, %136 : vector<8x128xf32>
    %138 = math.tanh %132 : vector<8x128xf32>
    %139 = vector.extract_strided_slice %137 {offsets = [0, 0], sizes = [8, 32], strides = [1, 1]} : vector<8x128xf32> to vector<8x32xf32>
    %140 = vector.extract_strided_slice %137 {offsets = [0, 32], sizes = [8, 32], strides = [1, 1]} : vector<8x128xf32> to vector<8x32xf32>
    %141 = vector.extract_strided_slice %138 {offsets = [0, 64], sizes = [8, 32], strides = [1, 1]} : vector<8x128xf32> to vector<8x32xf32>
    %142 = vector.extract_strided_slice %137 {offsets = [0, 96], sizes = [8, 32], strides = [1, 1]} : vector<8x128xf32> to vector<8x32xf32>
    %143 = arith.mulf %140, %117 : vector<8x32xf32>
    %144 = arith.mulf %139, %141 : vector<8x32xf32>
    %145 = arith.addf %143, %144 : vector<8x32xf32>
    %146 = math.tanh %145 : vector<8x32xf32>
    %147 = arith.mulf %142, %146 : vector<8x32xf32>
    %cst_61 = arith.constant dense<0.000000e+00> : vector<8x32xf32>
    %148 = tpu.matmul %147, %2, %cst_61 {dimension_numbers = #tpu.dot_dimension_numbers<[1], [0], [0], [1], [0, 0, 1, 1], [], []>} : vector<8x32xf32>, vector<32x32xf32>, vector<8x32xf32> -> vector<8x32xf32>
    %149 = arith.addf %148, %6 : vector<8x32xf32>
    %cst_62 = arith.constant 0.000000e+00 : f32
    %150 = vector.broadcast %cst_62 : f32 to vector<8x32xf32>
    %151 = arith.maximumf %149, %150 : vector<8x32xf32>
    %cst_63 = arith.constant dense<0.000000e+00> : vector<8x128xf32>
    %152 = tpu.matmul %151, %3, %cst_63 {dimension_numbers = #tpu.dot_dimension_numbers<[1], [0], [0], [1], [0, 0, 1, 1], [], []>} : vector<8x32xf32>, vector<32x128xf32>, vector<8x128xf32> -> vector<8x128xf32>
    %153 = arith.addf %152, %9 : vector<8x128xf32>
    %154 = math.tanh %153 : vector<8x128xf32>
    %cst_64 = arith.constant 2.000000e+00 : f32
    %155 = vector.broadcast %cst_64 : f32 to vector<8x128xf32>
    %156 = arith.mulf %155, %154 : vector<8x128xf32>
    %c32_65 = arith.constant 32 : index
    %c0_66 = arith.constant 0 : index
    %157 = vector.load %arg10[%c32_65, %c0_66] : memref<64x128xf32, #tpu.memory_space<vmem>>, vector<8x128xf32>
    tpu.vector_store %arg10[%c32_65, %c0_66], %156 {strides = array<i32>} : memref<64x128xf32, #tpu.memory_space<vmem>>, vector<8x128xf32>,
    %c40 = arith.constant 40 : index
    %c0_67 = arith.constant 0 : index
    %158 = vector.load %arg13[%c40, %c0_67] : memref<64x128xf32, #tpu.memory_space<vmem>>, vector<8x128xf32>
    %cst_68 = arith.constant dense<0.000000e+00> : vector<8x128xf32>
    %159 = tpu.matmul %147, %1, %cst_68 {dimension_numbers = #tpu.dot_dimension_numbers<[1], [0], [0], [1], [0, 0, 1, 1], [], []>} : vector<8x32xf32>, vector<32x128xf32>, vector<8x128xf32> -> vector<8x128xf32>
    %160 = arith.addf %158, %159 : vector<8x128xf32>
    %161 = arith.negf %160 : vector<8x128xf32>
    %162 = math.exp %161 : vector<8x128xf32>
    %cst_69 = arith.constant 1.000000e+00 : f32
    %163 = vector.broadcast %cst_69 : f32 to vector<8x128xf32>
    %164 = arith.addf %163, %162 : vector<8x128xf32>
    %165 = arith.divf %163, %164 : vector<8x128xf32>
    %166 = math.tanh %160 : vector<8x128xf32>
    %167 = vector.extract_strided_slice %165 {offsets = [0, 0], sizes = [8, 32], strides = [1, 1]} : vector<8x128xf32> to vector<8x32xf32>
    %168 = vector.extract_strided_slice %165 {offsets = [0, 32], sizes = [8, 32], strides = [1, 1]} : vector<8x128xf32> to vector<8x32xf32>
    %169 = vector.extract_strided_slice %166 {offsets = [0, 64], sizes = [8, 32], strides = [1, 1]} : vector<8x128xf32> to vector<8x32xf32>
    %170 = vector.extract_strided_slice %165 {offsets = [0, 96], sizes = [8, 32], strides = [1, 1]} : vector<8x128xf32> to vector<8x32xf32>
    %171 = arith.mulf %168, %145 : vector<8x32xf32>
    %172 = arith.mulf %167, %169 : vector<8x32xf32>
    %173 = arith.addf %171, %172 : vector<8x32xf32>
    %174 = math.tanh %173 : vector<8x32xf32>
    %175 = arith.mulf %170, %174 : vector<8x32xf32>
    %cst_70 = arith.constant dense<0.000000e+00> : vector<8x32xf32>
    %176 = tpu.matmul %175, %2, %cst_70 {dimension_numbers = #tpu.dot_dimension_numbers<[1], [0], [0], [1], [0, 0, 1, 1], [], []>} : vector<8x32xf32>, vector<32x32xf32>, vector<8x32xf32> -> vector<8x32xf32>
    %177 = arith.addf %176, %6 : vector<8x32xf32>
    %cst_71 = arith.constant 0.000000e+00 : f32
    %178 = vector.broadcast %cst_71 : f32 to vector<8x32xf32>
    %179 = arith.maximumf %177, %178 : vector<8x32xf32>
    %cst_72 = arith.constant dense<0.000000e+00> : vector<8x128xf32>
    %180 = tpu.matmul %179, %3, %cst_72 {dimension_numbers = #tpu.dot_dimension_numbers<[1], [0], [0], [1], [0, 0, 1, 1], [], []>} : vector<8x32xf32>, vector<32x128xf32>, vector<8x128xf32> -> vector<8x128xf32>
    %181 = arith.addf %180, %9 : vector<8x128xf32>
    %182 = math.tanh %181 : vector<8x128xf32>
    %cst_73 = arith.constant 2.000000e+00 : f32
    %183 = vector.broadcast %cst_73 : f32 to vector<8x128xf32>
    %184 = arith.mulf %183, %182 : vector<8x128xf32>
    %c40_74 = arith.constant 40 : index
    %c0_75 = arith.constant 0 : index
    %185 = vector.load %arg10[%c40_74, %c0_75] : memref<64x128xf32, #tpu.memory_space<vmem>>, vector<8x128xf32>
    tpu.vector_store %arg10[%c40_74, %c0_75], %184 {strides = array<i32>} : memref<64x128xf32, #tpu.memory_space<vmem>>, vector<8x128xf32>,
    %c48 = arith.constant 48 : index
    %c0_76 = arith.constant 0 : index
    %186 = vector.load %arg13[%c48, %c0_76] : memref<64x128xf32, #tpu.memory_space<vmem>>, vector<8x128xf32>
    %cst_77 = arith.constant dense<0.000000e+00> : vector<8x128xf32>
    %187 = tpu.matmul %175, %1, %cst_77 {dimension_numbers = #tpu.dot_dimension_numbers<[1], [0], [0], [1], [0, 0, 1, 1], [], []>} : vector<8x32xf32>, vector<32x128xf32>, vector<8x128xf32> -> vector<8x128xf32>
    %188 = arith.addf %186, %187 : vector<8x128xf32>
    %189 = arith.negf %188 : vector<8x128xf32>
    %190 = math.exp %189 : vector<8x128xf32>
    %cst_78 = arith.constant 1.000000e+00 : f32
    %191 = vector.broadcast %cst_78 : f32 to vector<8x128xf32>
    %192 = arith.addf %191, %190 : vector<8x128xf32>
    %193 = arith.divf %191, %192 : vector<8x128xf32>
    %194 = math.tanh %188 : vector<8x128xf32>
    %195 = vector.extract_strided_slice %193 {offsets = [0, 0], sizes = [8, 32], strides = [1, 1]} : vector<8x128xf32> to vector<8x32xf32>
    %196 = vector.extract_strided_slice %193 {offsets = [0, 32], sizes = [8, 32], strides = [1, 1]} : vector<8x128xf32> to vector<8x32xf32>
    %197 = vector.extract_strided_slice %194 {offsets = [0, 64], sizes = [8, 32], strides = [1, 1]} : vector<8x128xf32> to vector<8x32xf32>
    %198 = vector.extract_strided_slice %193 {offsets = [0, 96], sizes = [8, 32], strides = [1, 1]} : vector<8x128xf32> to vector<8x32xf32>
    %199 = arith.mulf %196, %173 : vector<8x32xf32>
    %200 = arith.mulf %195, %197 : vector<8x32xf32>
    %201 = arith.addf %199, %200 : vector<8x32xf32>
    %202 = math.tanh %201 : vector<8x32xf32>
    %203 = arith.mulf %198, %202 : vector<8x32xf32>
    %cst_79 = arith.constant dense<0.000000e+00> : vector<8x32xf32>
    %204 = tpu.matmul %203, %2, %cst_79 {dimension_numbers = #tpu.dot_dimension_numbers<[1], [0], [0], [1], [0, 0, 1, 1], [], []>} : vector<8x32xf32>, vector<32x32xf32>, vector<8x32xf32> -> vector<8x32xf32>
    %205 = arith.addf %204, %6 : vector<8x32xf32>
    %cst_80 = arith.constant 0.000000e+00 : f32
    %206 = vector.broadcast %cst_80 : f32 to vector<8x32xf32>
    %207 = arith.maximumf %205, %206 : vector<8x32xf32>
    %cst_81 = arith.constant dense<0.000000e+00> : vector<8x128xf32>
    %208 = tpu.matmul %207, %3, %cst_81 {dimension_numbers = #tpu.dot_dimension_numbers<[1], [0], [0], [1], [0, 0, 1, 1], [], []>} : vector<8x32xf32>, vector<32x128xf32>, vector<8x128xf32> -> vector<8x128xf32>
    %209 = arith.addf %208, %9 : vector<8x128xf32>
    %210 = math.tanh %209 : vector<8x128xf32>
    %cst_82 = arith.constant 2.000000e+00 : f32
    %211 = vector.broadcast %cst_82 : f32 to vector<8x128xf32>
    %212 = arith.mulf %211, %210 : vector<8x128xf32>
    %c48_83 = arith.constant 48 : index
    %c0_84 = arith.constant 0 : index
    %213 = vector.load %arg10[%c48_83, %c0_84] : memref<64x128xf32, #tpu.memory_space<vmem>>, vector<8x128xf32>
    tpu.vector_store %arg10[%c48_83, %c0_84], %212 {strides = array<i32>} : memref<64x128xf32, #tpu.memory_space<vmem>>, vector<8x128xf32>,
    %c56 = arith.constant 56 : index
    %c0_85 = arith.constant 0 : index
    %214 = vector.load %arg13[%c56, %c0_85] : memref<64x128xf32, #tpu.memory_space<vmem>>, vector<8x128xf32>
    %cst_86 = arith.constant dense<0.000000e+00> : vector<8x128xf32>
    %215 = tpu.matmul %203, %1, %cst_86 {dimension_numbers = #tpu.dot_dimension_numbers<[1], [0], [0], [1], [0, 0, 1, 1], [], []>} : vector<8x32xf32>, vector<32x128xf32>, vector<8x128xf32> -> vector<8x128xf32>
    %216 = arith.addf %214, %215 : vector<8x128xf32>
    %217 = arith.negf %216 : vector<8x128xf32>
    %218 = math.exp %217 : vector<8x128xf32>
    %cst_87 = arith.constant 1.000000e+00 : f32
    %219 = vector.broadcast %cst_87 : f32 to vector<8x128xf32>
    %220 = arith.addf %219, %218 : vector<8x128xf32>
    %221 = arith.divf %219, %220 : vector<8x128xf32>
    %222 = math.tanh %216 : vector<8x128xf32>
    %223 = vector.extract_strided_slice %221 {offsets = [0, 0], sizes = [8, 32], strides = [1, 1]} : vector<8x128xf32> to vector<8x32xf32>
    %224 = vector.extract_strided_slice %221 {offsets = [0, 32], sizes = [8, 32], strides = [1, 1]} : vector<8x128xf32> to vector<8x32xf32>
    %225 = vector.extract_strided_slice %222 {offsets = [0, 64], sizes = [8, 32], strides = [1, 1]} : vector<8x128xf32> to vector<8x32xf32>
    %226 = vector.extract_strided_slice %221 {offsets = [0, 96], sizes = [8, 32], strides = [1, 1]} : vector<8x128xf32> to vector<8x32xf32>
    %227 = arith.mulf %224, %201 : vector<8x32xf32>
    %228 = arith.mulf %223, %225 : vector<8x32xf32>
    %229 = arith.addf %227, %228 : vector<8x32xf32>
    %230 = math.tanh %229 : vector<8x32xf32>
    %231 = arith.mulf %226, %230 : vector<8x32xf32>
    %cst_88 = arith.constant dense<0.000000e+00> : vector<8x32xf32>
    %232 = tpu.matmul %231, %2, %cst_88 {dimension_numbers = #tpu.dot_dimension_numbers<[1], [0], [0], [1], [0, 0, 1, 1], [], []>} : vector<8x32xf32>, vector<32x32xf32>, vector<8x32xf32> -> vector<8x32xf32>
    %233 = arith.addf %232, %6 : vector<8x32xf32>
    %cst_89 = arith.constant 0.000000e+00 : f32
    %234 = vector.broadcast %cst_89 : f32 to vector<8x32xf32>
    %235 = arith.maximumf %233, %234 : vector<8x32xf32>
    %cst_90 = arith.constant dense<0.000000e+00> : vector<8x128xf32>
    %236 = tpu.matmul %235, %3, %cst_90 {dimension_numbers = #tpu.dot_dimension_numbers<[1], [0], [0], [1], [0, 0, 1, 1], [], []>} : vector<8x32xf32>, vector<32x128xf32>, vector<8x128xf32> -> vector<8x128xf32>
    %237 = arith.addf %236, %9 : vector<8x128xf32>
    %238 = math.tanh %237 : vector<8x128xf32>
    %cst_91 = arith.constant 2.000000e+00 : f32
    %239 = vector.broadcast %cst_91 : f32 to vector<8x128xf32>
    %240 = arith.mulf %239, %238 : vector<8x128xf32>
    %c56_92 = arith.constant 56 : index
    %c0_93 = arith.constant 0 : index
    %241 = vector.load %arg10[%c56_92, %c0_93] : memref<64x128xf32, #tpu.memory_space<vmem>>, vector<8x128xf32>
    tpu.vector_store %arg10[%c56_92, %c0_93], %240 {strides = array<i32>} : memref<64x128xf32, #tpu.memory_space<vmem>>, vector<8x128xf32>,
    %c0_94 = arith.constant 0 : index
    %c0_95 = arith.constant 0 : index
    %242 = vector.load %arg11[%c0_94, %c0_95] : memref<8x32xf32, #tpu.memory_space<vmem>>, vector<8x32xf32>
    tpu.vector_store %arg11[%c0_94, %c0_95], %231 {strides = array<i32>} : memref<8x32xf32, #tpu.memory_space<vmem>>, vector<8x32xf32>,
    %c0_96 = arith.constant 0 : index
    %c0_97 = arith.constant 0 : index
    %243 = vector.load %arg12[%c0_96, %c0_97] : memref<8x32xf32, #tpu.memory_space<vmem>>, vector<8x32xf32>
    tpu.vector_store %arg12[%c0_96, %c0_97], %229 {strides = array<i32>} : memref<8x32xf32, #tpu.memory_space<vmem>>, vector<8x32xf32>,
    return
  }
}

</mosaic_0001>

<llo_original>
// kernel: actor_forward.1
$region0: #{actor_forward.1}
  #allocation0 [shape = 'u32[]', space=smem, size = 0x4, offset = 0x4, fixed_abs, tag = 'smem constant byte address 0x4 - core index']
  #allocation1 [shape = 'u32[144,128]{1,0:T(1,128)}', space=vmem, size = 0x12000, scoped, tag = 'internal scratch']
  #allocation2 [shape = 'f32[64,128]{1,0:T(8,128)}', space=vmem, size = 0x8000, scoped, tag = 'scratch operand']
  %s0 = inlined_call_operand.vmem [shape: f32[64,8], index: 0, kind: input, shape index: {}]
  %s1 = inlined_call_operand.vmem [shape: f32[8,128], index: 1, kind: input, shape index: {}]
  %s2 = inlined_call_operand.vmem [shape: f32[32,128], index: 2, kind: input, shape index: {}]
  %s3 = inlined_call_operand.vmem [shape: f32[1,128], index: 3, kind: input, shape index: {}]
  %s4 = inlined_call_operand.vmem [shape: f32[8,32], index: 4, kind: input, shape index: {}]
  %s5 = inlined_call_operand.vmem [shape: f32[8,32], index: 5, kind: input, shape index: {}]
  %s6 = inlined_call_operand.vmem [shape: f32[32,32], index: 6, kind: input, shape index: {}]
  %s7 = inlined_call_operand.vmem [shape: f32[1,32], index: 7, kind: input, shape index: {}]
  %s8 = inlined_call_operand.vmem [shape: f32[32,128], index: 8, kind: input, shape index: {}]
  %s9 = inlined_call_operand.vmem [shape: f32[1,128], index: 9, kind: input, shape index: {}]
  %s10 = inlined_call_operand.vmem [shape: f32[64,128], index: 10, kind: output, shape index: {0}]
  %s11 = inlined_call_operand.vmem [shape: f32[8,32], index: 11, kind: output, shape index: {1}]
  %s12 = inlined_call_operand.vmem [shape: f32[8,32], index: 12, kind: output, shape index: {2}]
  %13 = xla_tuple %s10, %s11, %s12
  %s14 = sld [smem:[#allocation0]]
  $region66: #{actor_forward.1} parent=0
    _
  %s16 = ssub.s32 1, %s14
  %s17 = scalar_select 0, %s16, %s14
  // Predicated region
  $region2: #{actor_forward.1} parent=0 // pred_check
    _
  $region3: #{actor_forward.1} parent=0 // pred_check_branch
    %19 = sbr.rel (0) target = $region5
  $region4: #{actor_forward.1} parent=0 // pred_region
    _
  $region5: #{actor_forward.1} parent=0 // pred_fallthru
    _
  // Predicated region
  $region6: #{actor_forward.1} parent=0 // pred_check
    _
  $region7: #{actor_forward.1} parent=0 // pred_check_branch
    %21 = sbr.rel (0) target = $region9
  $region8: #{actor_forward.1} parent=0 // pred_region
    _
  $region9: #{actor_forward.1} parent=0 // pred_fallthru
    _
  // Predicated region
  $region10: #{actor_forward.1} parent=0 // pred_check
    _
  $region11: #{actor_forward.1} parent=0 // pred_check_branch
    %23 = sbr.rel (0) target = $region13
  $region12: #{actor_forward.1} parent=0 // pred_region
    _
  $region13: #{actor_forward.1} parent=0 // pred_fallthru
    _
  // Predicated region
  $region14: #{actor_forward.1} parent=0 // pred_check
    _
  $region15: #{actor_forward.1} parent=0 // pred_check_branch
    %25 = sbr.rel (0) target = $region17
  $region16: #{actor_forward.1} parent=0 // pred_region
    _
  $region17: #{actor_forward.1} parent=0 // pred_fallthru
    _
  // Predicated region
  $region18: #{actor_forward.1} parent=0 // pred_check
    _
  $region19: #{actor_forward.1} parent=0 // pred_check_branch
    %27 = sbr.rel (0) target = $region21
  $region20: #{actor_forward.1} parent=0 // pred_region
    _
  $region21: #{actor_forward.1} parent=0 // pred_fallthru
    _
  // Predicated region
  $region22: #{actor_forward.1} parent=0 // pred_check
    _
  $region23: #{actor_forward.1} parent=0 // pred_check_branch
    %29 = sbr.rel (0) target = $region25
  $region24: #{actor_forward.1} parent=0 // pred_region
    _
  $region25: #{actor_forward.1} parent=0 // pred_fallthru
    _
  // Predicated region
  $region26: #{actor_forward.1} parent=0 // pred_check
    _
  $region27: #{actor_forward.1} parent=0 // pred_check_branch
    %31 = sbr.rel (0) target = $region29
  $region28: #{actor_forward.1} parent=0 // pred_region
    _
  $region29: #{actor_forward.1} parent=0 // pred_fallthru
    _
  // Predicated region
  $region30: #{actor_forward.1} parent=0 // pred_check
    _
  $region31: #{actor_forward.1} parent=0 // pred_check_branch
    %33 = sbr.rel (0) target = $region33
  $region32: #{actor_forward.1} parent=0 // pred_region
    _
  $region33: #{actor_forward.1} parent=0 // pred_fallthru
    _
  // Predicated region
  $region34: #{actor_forward.1} parent=0 // pred_check
    _
  $region35: #{actor_forward.1} parent=0 // pred_check_branch
    %35 = sbr.rel (0) target = $region37
  $region36: #{actor_forward.1} parent=0 // pred_region
    _
  $region37: #{actor_forward.1} parent=0 // pred_fallthru
    _
  // Predicated region
  $region38: #{actor_forward.1} parent=0 // pred_check
    _
  $region39: #{actor_forward.1} parent=0 // pred_check_branch
    %37 = sbr.rel (0) target = $region41
  $region40: #{actor_forward.1} parent=0 // pred_region
    _
  $region41: #{actor_forward.1} parent=0 // pred_fallthru
    _
  %v38 = vld [vmem:[%s1] sm:$0xff]
  %v39 = vld [vmem:[%s2] sm:$0xff]
  %v40 = vld [vmem:[%s2 + $0x8] sm:$0xff]
  %v41 = vld [vmem:[%s2 + $0x10] sm:$0xff]
  %v42 = vld [vmem:[%s2 + $0x18] sm:$0xff]
  %v43 = vld [vmem:[%s6] sm:$0xff]
  %v44 = vld [vmem:[%s6 + $0x8] sm:$0xff]
  %v45 = vld [vmem:[%s6 + $0x10] sm:$0xff]
  %v46 = vld [vmem:[%s6 + $0x18] sm:$0xff]
  %v47 = vld [vmem:[%s8] sm:$0xff]
  %v48 = vld [vmem:[%s8 + $0x8] sm:$0xff]
  %v49 = vld [vmem:[%s8 + $0x10] sm:$0xff]
  %v50 = vld [vmem:[%s8 + $0x18] sm:$0xff]
  %v51 = vld [vmem:[%s7] sm:$0x1]
  %v53 = vlaneseq
  %v54 = vshrl.u32 %v53, 7
  %v55 = vsub.s32 0, %v54
  %v56 = vrot.slane %v51, %v55
  %v58 = vld [vmem:[%s9] sm:$0x1]
  %v60 = vlaneseq
  %v61 = vshrl.u32 %v60, 7
  %v62 = vsub.s32 0, %v61
  %v63 = vrot.slane %v58, %v62
  %v65 = vld [vmem:[%s0] sm:$0xff]
  %v66 = vld [vmem:[%s0 + $0x8] sm:$0xff]
  %v67 = vld [vmem:[%s0 + $0x10] sm:$0xff]
  %v68 = vld [vmem:[%s0 + $0x18] sm:$0xff]
  %v69 = vld [vmem:[%s0 + $0x20] sm:$0xff]
  %v70 = vld [vmem:[%s0 + $0x28] sm:$0xff]
  %v71 = vld [vmem:[%s0 + $0x30] sm:$0xff]
  %v72 = vld [vmem:[%s0 + $0x38] sm:$0xff]
  %v73 = vld [vmem:[%s3] sm:$0x1]
  %v75 = vlaneseq
  %v76 = vshrl.u32 %v75, 7
  %v77 = vsub.s32 0, %v76
  %v78 = vrot.slane %v73, %v77
  %vm80 = vcmask 64512
  %v82 = vsel %vm80, %v65, 0
  %v85 = vsel %vm80, %v66, 0
  %v88 = vsel %vm80, %v67, 0
  %v91 = vsel %vm80, %v68, 0
  %v94 = vsel %vm80, %v69, 0
  %v97 = vsel %vm80, %v70, 0
  %v100 = vsel %vm80, %v71, 0
  %v103 = vsel %vm80, %v72, 0
  %105 = vmatprep.subr.mxu0 0.0
  %106 = vmatpush1.msra.mxu0 0.0
  %107 = vmatprep.subr.mxu0 0.0
  %108 = vmatpush1.msra.mxu0 0.0
  %109 = vmatprep.subr.mxu0 0.0
  %110 = vmatpush1.msra.mxu0 0.0
  %111 = vmatprep.subr.mxu0 0.0
  %112 = vmatpush1.msra.mxu0 0.0
  %113 = vmatprep.subr.mxu0 0.0
  %114 = vmatpush1.msra.mxu0 0.0
  %115 = vmatprep.subr.mxu0 0.0
  %116 = vmatpush1.msra.mxu0 0.0
  %117 = vmatprep.subr.mxu0 0.0
  %118 = vmatpush1.msra.mxu0 0.0
  %119 = vmatprep.subr.mxu0 0.0
  %120 = vmatpush1.msra.mxu0 0.0
  %121 = vmatprep.subr.mxu0 0.0
  %122 = vmatpush1.msra.mxu0 0.0
  %123 = vmatprep.subr.mxu0 0.0
  %124 = vmatpush1.msra.mxu0 0.0
  %125 = vmatprep.subr.mxu0 0.0
  %126 = vmatpush1.msra.mxu0 0.0
  %127 = vmatprep.subr.mxu0 0.0
  %128 = vmatpush1.msra.mxu0 0.0
  %129 = vmatprep.subr.mxu0 0.0
  %130 = vmatpush1.msra.mxu0 0.0
  %131 = vmatprep.subr.mxu0 0.0
  %132 = vmatpush1.msra.mxu0 0.0
  %133 = vmatprep.subr.mxu0 0.0
  %134 = vmatpush1.msra.mxu0 0.0
  %135 = vmatprep.subr.mxu0 0.0
  %136 = vmatpush1.msra.mxu0 %v38
  %137 = vmatprep.subr.mxu0 0.0
  %138 = vmatpush2.msra.mxu0 0.0
  %139 = vmatprep.subr.mxu0 0.0
  %140 = vmatpush2.msra.mxu0 0.0
  %141 = vmatprep.subr.mxu0 0.0
  %142 = vmatpush2.msra.mxu0 0.0
  %143 = vmatprep.subr.mxu0 0.0
  %144 = vmatpush2.msra.mxu0 0.0
  %145 = vmatprep.subr.mxu0 0.0
  %146 = vmatpush2.msra.mxu0 0.0
  %147 = vmatprep.subr.mxu0 0.0
  %148 = vmatpush2.msra.mxu0 0.0
  %149 = vmatprep.subr.mxu0 0.0
  %150 = vmatpush2.msra.mxu0 0.0
  %151 = vmatprep.subr.mxu0 0.0
  %152 = vmatpush2.msra.mxu0 0.0
  %153 = vmatprep.subr.mxu0 0.0
  %154 = vmatpush2.msra.mxu0 0.0
  %155 = vmatprep.subr.mxu0 0.0
  %156 = vmatpush2.msra.mxu0 0.0
  %157 = vmatprep.subr.mxu0 0.0
  %158 = vmatpush2.msra.mxu0 0.0
  %159 = vmatprep.subr.mxu0 0.0
  %160 = vmatpush2.msra.mxu0 0.0
  %161 = vmatprep.subr.mxu0 0.0
  %162 = vmatpush2.msra.mxu0 0.0
  %163 = vmatprep.subr.mxu0 0.0
  %164 = vmatpush2.msra.mxu0 0.0
  %165 = vmatprep.subr.mxu0 0.0
  %166 = vmatpush2.msra.mxu0 0.0
  %167 = vmatprep.subr.mxu0 0.0
  %168 = vmatpush2.msra.mxu0 0.0
  %169 = vmatprep.mubr.f32.mxu0 0.0
  %170 = vmatmul.mubr.f32.gmra.mxu0 %v82
  %v171 = vpop.f32.mrf.mxu0
  %v172 = vadd.f32 %v78, %v171
  %v173 = vpop.f32.mrf.mxu0
  %174 = vmatprep.mubr.f32.mxu0 0.0
  %175 = vmatmul.mubr.f32.gmra.mxu0 %v85
  %v176 = vpop.f32.mrf.mxu0
  %v177 = vadd.f32 %v78, %v176
  %v178 = vpop.f32.mrf.mxu0
  %179 = vmatprep.mubr.f32.mxu0 0.0
  %180 = vmatmul.mubr.f32.gmra.mxu0 %v88
  %v181 = vpop.f32.mrf.mxu0
  %v182 = vadd.f32 %v78, %v181
  %v183 = vpop.f32.mrf.mxu0
  %184 = vmatprep.mubr.f32.mxu0 0.0
  %185 = vmatmul.mubr.f32.gmra.mxu0 %v91
  %v186 = vpop.f32.mrf.mxu0
  %v187 = vadd.f32 %v78, %v186
  %v188 = vpop.f32.mrf.mxu0
  %189 = vmatprep.mubr.f32.mxu0 0.0
  %190 = vmatmul.mubr.f32.gmra.mxu0 %v94
  %v191 = vpop.f32.mrf.mxu0
  %v192 = vadd.f32 %v78, %v191
  %v193 = vpop.f32.mrf.mxu0
  %194 = vmatprep.mubr.f32.mxu0 0.0
  %195 = vmatmul.mubr.f32.gmra.mxu0 %v97
  %v196 = vpop.f32.mrf.mxu0
  %v197 = vadd.f32 %v78, %v196
  %v198 = vpop.f32.mrf.mxu0
  %199 = vmatprep.mubr.f32.mxu0 0.0
  %200 = vmatmul.mubr.f32.gmra.mxu0 %v100
  %v201 = vpop.f32.mrf.mxu0
  %v202 = vadd.f32 %v78, %v201
  %v203 = vpop.f32.mrf.mxu0
  %204 = vmatprep.mubr.f32.mxu0 0.0
  %205 = vmatmul.mubr.f32.gmra.mxu0 %v103
  %v206 = vpop.f32.mrf.mxu0
  %v207 = vadd.f32 %v78, %v206
  %v208 = vpop.f32.mrf.mxu0
  %209 = vdwg.mxu0
  %210 = vst [vmem:[#allocation2] sm:$0xff] %v172
  %211 = vst [vmem:[#allocation2 + $0x8] sm:$0xff] %v177
  %212 = vst [vmem:[#allocation2 + $0x10] sm:$0xff] %v182
  %213 = vst [vmem:[#allocation2 + $0x18] sm:$0xff] %v187
  %214 = vst [vmem:[#allocation2 + $0x20] sm:$0xff] %v192
  %215 = vst [vmem:[#allocation2 + $0x28] sm:$0xff] %v197
  %216 = vst [vmem:[#allocation2 + $0x30] sm:$0xff] %v202
  %217 = vst [vmem:[#allocation2 + $0x38] sm:$0xff] %v207
  %v218 = vld [vmem:[%s4] sm:$0xff]
  %v219 = vld [vmem:[%s5] sm:$0xff]
  %v220 = vld [vmem:[#allocation2] sm:$0xff]
  %vm221 = vcmask 261120
  %v223 = vsel %vm221, %v218, 0
  %225 = vmatprep.subr.mxu0 0.0
  %226 = vmatpush1.msra.mxu0 0.0
  %227 = vmatprep.subr.mxu0 0.0
  %228 = vmatpush1.msra.mxu0 0.0
  %229 = vmatprep.subr.mxu0 0.0
  %230 = vmatpush1.msra.mxu0 0.0
  %231 = vmatprep.subr.mxu0 0.0
  %232 = vmatpush1.msra.mxu0 0.0
  %233 = vmatprep.subr.mxu0 0.0
  %234 = vmatpush1.msra.mxu0 0.0
  %235 = vmatprep.subr.mxu0 0.0
  %236 = vmatpush1.msra.mxu0 0.0
  %237 = vmatprep.subr.mxu0 0.0
  %238 = vmatpush1.msra.mxu0 0.0
  %239 = vmatprep.subr.mxu0 0.0
  %240 = vmatpush1.msra.mxu0 0.0
  %241 = vmatprep.subr.mxu0 0.0
  %242 = vmatpush1.msra.mxu0 0.0
  %243 = vmatprep.subr.mxu0 0.0
  %244 = vmatpush1.msra.mxu0 0.0
  %245 = vmatprep.subr.mxu0 0.0
  %246 = vmatpush1.msra.mxu0 0.0
  %247 = vmatprep.subr.mxu0 0.0
  %248 = vmatpush1.msra.mxu0 0.0
  %249 = vmatprep.subr.mxu0 0.0
  %250 = vmatpush1.msra.mxu0 %v42
  %251 = vmatprep.subr.mxu0 0.0
  %252 = vmatpush1.msra.mxu0 %v41
  %253 = vmatprep.subr.mxu0 0.0
  %254 = vmatpush1.msra.mxu0 %v40
  %255 = vmatprep.subr.mxu0 0.0
  %256 = vmatpush1.msra.mxu0 %v39
  %257 = vmatprep.subr.mxu0 0.0
  %258 = vmatpush2.msra.mxu0 0.0
  %259 = vmatprep.subr.mxu0 0.0
  %260 = vmatpush2.msra.mxu0 0.0
  %261 = vmatprep.subr.mxu0 0.0
  %262 = vmatpush2.msra.mxu0 0.0
  %263 = vmatprep.subr.mxu0 0.0
  %264 = vmatpush2.msra.mxu0 0.0
  %265 = vmatprep.subr.mxu0 0.0
  %266 = vmatpush2.msra.mxu0 0.0
  %267 = vmatprep.subr.mxu0 0.0
  %268 = vmatpush2.msra.mxu0 0.0
  %269 = vmatprep.subr.mxu0 0.0
  %270 = vmatpush2.msra.mxu0 0.0
  %271 = vmatprep.subr.mxu0 0.0
  %272 = vmatpush2.msra.mxu0 0.0
  %273 = vmatprep.subr.mxu0 0.0
  %274 = vmatpush2.msra.mxu0 0.0
  %275 = vmatprep.subr.mxu0 0.0
  %276 = vmatpush2.msra.mxu0 0.0
  %277 = vmatprep.subr.mxu0 0.0
  %278 = vmatpush2.msra.mxu0 0.0
  %279 = vmatprep.subr.mxu0 0.0
  %280 = vmatpush2.msra.mxu0 0.0
  %281 = vmatprep.subr.mxu0 0.0
  %282 = vmatpush2.msra.mxu0 0.0
  %283 = vmatprep.subr.mxu0 0.0
  %284 = vmatpush2.msra.mxu0 0.0
  %285 = vmatprep.subr.mxu0 0.0
  %286 = vmatpush2.msra.mxu0 0.0
  %287 = vmatprep.subr.mxu0 0.0
  %288 = vmatpush2.msra.mxu0 0.0
  %289 = vmatprep.mubr.f32.mxu0 0.0
  %290 = vmatmul.mubr.f32.gmra.mxu0 %v223
  %v291 = vpop.f32.mrf.mxu0
  %v292 = vadd.f32 0.0, %v291
  %v293 = vpop.f32.mrf.mxu0
  %294 = vdwg.mxu0
  %v295 = vadd.f32 %v220, %v292
  %v296 = vxor.u32 %v295, 2147483648
  %v297 = vmul.f32 %v296, 1.442695
  %v298 = vpow.pop %v297
  %v299 = vadd.f32 %v298, 1.0
  %v300 = vrcp.pop %v299
  %v301 = vmul.f32 1.0, %v300
  %v302 = vtanh.pop %v295
  %304 = vrot.lane.b32.xlu0 %v219, 32
  %v305 = vpop.permute.xlu0 %304
  %v307 = vmul.f32 %v301, %v305
  %309 = vrot.lane.b32.xlu0 %v302, 64
  %v310 = vpop.permute.xlu0 %309
  %v312 = vmul.f32 %v301, %v310
  %314 = vrot.lane.b32.xlu0 %v312, 32
  %v315 = vpop.permute.xlu0 %314
  %v317 = vadd.f32 %v307, %v315
  %v318 = vtanh.pop %v317
  %320 = vrot.lane.b32.xlu0 %v318, 64
  %v321 = vpop.permute.xlu0 %320
  %v323 = vmul.f32 %v301, %v321
  %325 = vrot.lane.b32.xlu0 %v323, 32
  %v326 = vpop.permute.xlu0 %325
  %v327 = vsel %vm221, %v326, 0
  %329 = vmatprep.subr.mxu0 0.0
  %330 = vmatpush1.msra.mxu0 0.0
  %331 = vmatprep.subr.mxu0 0.0
  %332 = vmatpush1.msra.mxu0 0.0
  %333 = vmatprep.subr.mxu0 0.0
  %334 = vmatpush1.msra.mxu0 0.0
  %335 = vmatprep.subr.mxu0 0.0
  %336 = vmatpush1.msra.mxu0 0.0
  %337 = vmatprep.subr.mxu0 0.0
  %338 = vmatpush1.msra.mxu0 0.0
  %339 = vmatprep.subr.mxu0 0.0
  %340 = vmatpush1.msra.mxu0 0.0
  %341 = vmatprep.subr.mxu0 0.0
  %342 = vmatpush1.msra.mxu0 0.0
  %343 = vmatprep.subr.mxu0 0.0
  %344 = vmatpush1.msra.mxu0 0.0
  %345 = vmatprep.subr.mxu0 0.0
  %346 = vmatpush1.msra.mxu0 0.0
  %347 = vmatprep.subr.mxu0 0.0
  %348 = vmatpush1.msra.mxu0 0.0
  %349 = vmatprep.subr.mxu0 0.0
  %350 = vmatpush1.msra.mxu0 0.0
  %351 = vmatprep.subr.mxu0 0.0
  %352 = vmatpush1.msra.mxu0 0.0
  %353 = vmatprep.subr.mxu0 0.0
  %354 = vmatpush1.msra.mxu0 %v46
  %355 = vmatprep.subr.mxu0 0.0
  %356 = vmatpush1.msra.mxu0 %v45
  %357 = vmatprep.subr.mxu0 0.0
  %358 = vmatpush1.msra.mxu0 %v44
  %359 = vmatprep.subr.mxu0 0.0
  %360 = vmatpush1.msra.mxu0 %v43
  %361 = vmatprep.subr.mxu0 0.0
  %362 = vmatpush2.msra.mxu0 0.0
  %363 = vmatprep.subr.mxu0 0.0
  %364 = vmatpush2.msra.mxu0 0.0
  %365 = vmatprep.subr.mxu0 0.0
  %366 = vmatpush2.msra.mxu0 0.0
  %367 = vmatprep.subr.mxu0 0.0
  %368 = vmatpush2.msra.mxu0 0.0
  %369 = vmatprep.subr.mxu0 0.0
  %370 = vmatpush2.msra.mxu0 0.0
  %371 = vmatprep.subr.mxu0 0.0
  %372 = vmatpush2.msra.mxu0 0.0
  %373 = vmatprep.subr.mxu0 0.0
  %374 = vmatpush2.msra.mxu0 0.0
  %375 = vmatprep.subr.mxu0 0.0
  %376 = vmatpush2.msra.mxu0 0.0
  %377 = vmatprep.subr.mxu0 0.0
  %378 = vmatpush2.msra.mxu0 0.0
  %379 = vmatprep.subr.mxu0 0.0
  %380 = vmatpush2.msra.mxu0 0.0
  %381 = vmatprep.subr.mxu0 0.0
  %382 = vmatpush2.msra.mxu0 0.0
  %383 = vmatprep.subr.mxu0 0.0
  %384 = vmatpush2.msra.mxu0 0.0
  %385 = vmatprep.subr.mxu0 0.0
  %386 = vmatpush2.msra.mxu0 0.0
  %387 = vmatprep.subr.mxu0 0.0
  %388 = vmatpush2.msra.mxu0 0.0
  %389 = vmatprep.subr.mxu0 0.0
  %390 = vmatpush2.msra.mxu0 0.0
  %391 = vmatprep.subr.mxu0 0.0
  %392 = vmatpush2.msra.mxu0 0.0
  %393 = vmatprep.mubr.f32.mxu0 0.0
  %394 = vmatmul.mubr.f32.gmra.mxu0 %v327
  %v395 = vpop.f32.mrf.mxu0
  %v396 = vadd.f32 %v56, %v395
  %v397 = vpop.f32.mrf.mxu0
  %398 = vdwg.mxu0
  %v399 = vmax.f32 %v396, 0.0
  %v401 = vsel %vm221, %v399, 0
  %403 = vmatprep.subr.mxu0 0.0
  %404 = vmatpush1.msra.mxu0 0.0
  %405 = vmatprep.subr.mxu0 0.0
  %406 = vmatpush1.msra.mxu0 0.0
  %407 = vmatprep.subr.mxu0 0.0
  %408 = vmatpush1.msra.mxu0 0.0
  %409 = vmatprep.subr.mxu0 0.0
  %410 = vmatpush1.msra.mxu0 0.0
  %411 = vmatprep.subr.mxu0 0.0
  %412 = vmatpush1.msra.mxu0 0.0
  %413 = vmatprep.subr.mxu0 0.0
  %414 = vmatpush1.msra.mxu0 0.0
  %415 = vmatprep.subr.mxu0 0.0
  %416 = vmatpush1.msra.mxu0 0.0
  %417 = vmatprep.subr.mxu0 0.0
  %418 = vmatpush1.msra.mxu0 0.0
  %419 = vmatprep.subr.mxu0 0.0
  %420 = vmatpush1.msra.mxu0 0.0
  %421 = vmatprep.subr.mxu0 0.0
  %422 = vmatpush1.msra.mxu0 0.0
  %423 = vmatprep.subr.mxu0 0.0
  %424 = vmatpush1.msra.mxu0 0.0
  %425 = vmatprep.subr.mxu0 0.0
  %426 = vmatpush1.msra.mxu0 0.0
  %427 = vmatprep.subr.mxu0 0.0
  %428 = vmatpush1.msra.mxu0 %v50
  %429 = vmatprep.subr.mxu0 0.0
  %430 = vmatpush1.msra.mxu0 %v49
  %431 = vmatprep.subr.mxu0 0.0
  %432 = vmatpush1.msra.mxu0 %v48
  %433 = vmatprep.subr.mxu0 0.0
  %434 = vmatpush1.msra.mxu0 %v47
  %435 = vmatprep.subr.mxu0 0.0
  %436 = vmatpush2.msra.mxu0 0.0
  %437 = vmatprep.subr.mxu0 0.0
  %438 = vmatpush2.msra.mxu0 0.0
  %439 = vmatprep.subr.mxu0 0.0
  %440 = vmatpush2.msra.mxu0 0.0
  %441 = vmatprep.subr.mxu0 0.0
  %442 = vmatpush2.msra.mxu0 0.0
  %443 = vmatprep.subr.mxu0 0.0
  %444 = vmatpush2.msra.mxu0 0.0
  %445 = vmatprep.subr.mxu0 0.0
  %446 = vmatpush2.msra.mxu0 0.0
  %447 = vmatprep.subr.mxu0 0.0
  %448 = vmatpush2.msra.mxu0 0.0
  %449 = vmatprep.subr.mxu0 0.0
  %450 = vmatpush2.msra.mxu0 0.0
  %451 = vmatprep.subr.mxu0 0.0
  %452 = vmatpush2.msra.mxu0 0.0
  %453 = vmatprep.subr.mxu0 0.0
  %454 = vmatpush2.msra.mxu0 0.0
  %455 = vmatprep.subr.mxu0 0.0
  %456 = vmatpush2.msra.mxu0 0.0
  %457 = vmatprep.subr.mxu0 0.0
  %458 = vmatpush2.msra.mxu0 0.0
  %459 = vmatprep.subr.mxu0 0.0
  %460 = vmatpush2.msra.mxu0 0.0
  %461 = vmatprep.subr.mxu0 0.0
  %462 = vmatpush2.msra.mxu0 0.0
  %463 = vmatprep.subr.mxu0 0.0
  %464 = vmatpush2.msra.mxu0 0.0
  %465 = vmatprep.subr.mxu0 0.0
  %466 = vmatpush2.msra.mxu0 0.0
  %467 = vmatprep.mubr.f32.mxu0 0.0
  %468 = vmatmul.mubr.f32.gmra.mxu0 %v401
  %v469 = vpop.f32.mrf.mxu0
  %v470 = vadd.f32 %v63, %v469
  %v471 = vpop.f32.mrf.mxu0
  %472 = vdwg.mxu0
  %v473 = vtanh.pop %v470
  %v474 = vmul.f32 %v473, 2.0
  %475 = vst [vmem:[%s10] sm:$0xff] %v474
  %v476 = vld [vmem:[#allocation2 + $0x8] sm:$0xff]
  %477 = vmatprep.subr.mxu0 0.0
  %478 = vmatpush1.msra.mxu0 0.0
  %479 = vmatprep.subr.mxu0 0.0
  %480 = vmatpush1.msra.mxu0 0.0
  %481 = vmatprep.subr.mxu0 0.0
  %482 = vmatpush1.msra.mxu0 0.0
  %483 = vmatprep.subr.mxu0 0.0
  %484 = vmatpush1.msra.mxu0 0.0
  %485 = vmatprep.subr.mxu0 0.0
  %486 = vmatpush1.msra.mxu0 0.0
  %487 = vmatprep.subr.mxu0 0.0
  %488 = vmatpush1.msra.mxu0 0.0
  %489 = vmatprep.subr.mxu0 0.0
  %490 = vmatpush1.msra.mxu0 0.0
  %491 = vmatprep.subr.mxu0 0.0
  %492 = vmatpush1.msra.mxu0 0.0
  %493 = vmatprep.subr.mxu0 0.0
  %494 = vmatpush1.msra.mxu0 0.0
  %495 = vmatprep.subr.mxu0 0.0
  %496 = vmatpush1.msra.mxu0 0.0
  %497 = vmatprep.subr.mxu0 0.0
  %498 = vmatpush1.msra.mxu0 0.0
  %499 = vmatprep.subr.mxu0 0.0
  %500 = vmatpush1.msra.mxu0 0.0
  %501 = vmatprep.subr.mxu0 0.0
  %502 = vmatpush1.msra.mxu0 %v42
  %503 = vmatprep.subr.mxu0 0.0
  %504 = vmatpush1.msra.mxu0 %v41
  %505 = vmatprep.subr.mxu0 0.0
  %506 = vmatpush1.msra.mxu0 %v40
  %507 = vmatprep.subr.mxu0 0.0
  %508 = vmatpush1.msra.mxu0 %v39
  %509 = vmatprep.subr.mxu0 0.0
  %510 = vmatpush2.msra.mxu0 0.0
  %511 = vmatprep.subr.mxu0 0.0
  %512 = vmatpush2.msra.mxu0 0.0
  %513 = vmatprep.subr.mxu0 0.0
  %514 = vmatpush2.msra.mxu0 0.0
  %515 = vmatprep.subr.mxu0 0.0
  %516 = vmatpush2.msra.mxu0 0.0
  %517 = vmatprep.subr.mxu0 0.0
  %518 = vmatpush2.msra.mxu0 0.0
  %519 = vmatprep.subr.mxu0 0.0
  %520 = vmatpush2.msra.mxu0 0.0
  %521 = vmatprep.subr.mxu0 0.0
  %522 = vmatpush2.msra.mxu0 0.0
  %523 = vmatprep.subr.mxu0 0.0
  %524 = vmatpush2.msra.mxu0 0.0
  %525 = vmatprep.subr.mxu0 0.0
  %526 = vmatpush2.msra.mxu0 0.0
  %527 = vmatprep.subr.mxu0 0.0
  %528 = vmatpush2.msra.mxu0 0.0
  %529 = vmatprep.subr.mxu0 0.0
  %530 = vmatpush2.msra.mxu0 0.0
  %531 = vmatprep.subr.mxu0 0.0
  %532 = vmatpush2.msra.mxu0 0.0
  %533 = vmatprep.subr.mxu0 0.0
  %534 = vmatpush2.msra.mxu0 0.0
  %535 = vmatprep.subr.mxu0 0.0
  %536 = vmatpush2.msra.mxu0 0.0
  %537 = vmatprep.subr.mxu0 0.0
  %538 = vmatpush2.msra.mxu0 0.0
  %539 = vmatprep.subr.mxu0 0.0
  %540 = vmatpush2.msra.mxu0 0.0
  %541 = vmatprep.mubr.f32.mxu0 0.0
  %542 = vmatmul.mubr.f32.gmra.mxu0 %v327
  %v543 = vpop.f32.mrf.mxu0
  %v544 = vadd.f32 0.0, %v543
  %v545 = vpop.f32.mrf.mxu0
  %546 = vdwg.mxu0
  %v547 = vadd.f32 %v476, %v544
  %v548 = vxor.u32 %v547, 2147483648
  %v549 = vmul.f32 %v548, 1.442695
  %v550 = vpow.pop %v549
  %v551 = vadd.f32 %v550, 1.0
  %v552 = vrcp.pop %v551
  %v553 = vmul.f32 1.0, %v552
  %v554 = vtanh.pop %v547
  %v555 = vmul.f32 %v553, %v317
  %557 = vrot.lane.b32.xlu0 %v554, 64
  %v558 = vpop.permute.xlu0 %557
  %v560 = vmul.f32 %v553, %v558
  %562 = vrot.lane.b32.xlu0 %v560, 32
  %v563 = vpop.permute.xlu0 %562
  %v565 = vadd.f32 %v555, %v563
  %v566 = vtanh.pop %v565
  %568 = vrot.lane.b32.xlu0 %v566, 64
  %v569 = vpop.permute.xlu0 %568
  %v571 = vmul.f32 %v553, %v569
  %573 = vrot.lane.b32.xlu0 %v571, 32
  %v574 = vpop.permute.xlu0 %573
  %v575 = vsel %vm221, %v574, 0
  %577 = vmatprep.subr.mxu0 0.0
  %578 = vmatpush1.msra.mxu0 0.0
  %579 = vmatprep.subr.mxu0 0.0
  %580 = vmatpush1.msra.mxu0 0.0
  %581 = vmatprep.subr.mxu0 0.0
  %582 = vmatpush1.msra.mxu0 0.0
  %583 = vmatprep.subr.mxu0 0.0
  %584 = vmatpush1.msra.mxu0 0.0
  %585 = vmatprep.subr.mxu0 0.0
  %586 = vmatpush1.msra.mxu0 0.0
  %587 = vmatprep.subr.mxu0 0.0
  %588 = vmatpush1.msra.mxu0 0.0
  %589 = vmatprep.subr.mxu0 0.0
  %590 = vmatpush1.msra.mxu0 0.0
  %591 = vmatprep.subr.mxu0 0.0
  %592 = vmatpush1.msra.mxu0 0.0
  %593 = vmatprep.subr.mxu0 0.0
  %594 = vmatpush1.msra.mxu0 0.0
  %595 = vmatprep.subr.mxu0 0.0
  %596 = vmatpush1.msra.mxu0 0.0
  %597 = vmatprep.subr.mxu0 0.0
  %598 = vmatpush1.msra.mxu0 0.0
  %599 = vmatprep.subr.mxu0 0.0
  %600 = vmatpush1.msra.mxu0 0.0
  %601 = vmatprep.subr.mxu0 0.0
  %602 = vmatpush1.msra.mxu0 %v46
  %603 = vmatprep.subr.mxu0 0.0
  %604 = vmatpush1.msra.mxu0 %v45
  %605 = vmatprep.subr.mxu0 0.0
  %606 = vmatpush1.msra.mxu0 %v44
  %607 = vmatprep.subr.mxu0 0.0
  %608 = vmatpush1.msra.mxu0 %v43
  %609 = vmatprep.subr.mxu0 0.0
  %610 = vmatpush2.msra.mxu0 0.0
  %611 = vmatprep.subr.mxu0 0.0
  %612 = vmatpush2.msra.mxu0 0.0
  %613 = vmatprep.subr.mxu0 0.0
  %614 = vmatpush2.msra.mxu0 0.0
  %615 = vmatprep.subr.mxu0 0.0
  %616 = vmatpush2.msra.mxu0 0.0
  %617 = vmatprep.subr.mxu0 0.0
  %618 = vmatpush2.msra.mxu0 0.0
  %619 = vmatprep.subr.mxu0 0.0
  %620 = vmatpush2.msra.mxu0 0.0
  %621 = vmatprep.subr.mxu0 0.0
  %622 = vmatpush2.msra.mxu0 0.0
  %623 = vmatprep.subr.mxu0 0.0
  %624 = vmatpush2.msra.mxu0 0.0
  %625 = vmatprep.subr.mxu0 0.0
  %626 = vmatpush2.msra.mxu0 0.0
  %627 = vmatprep.subr.mxu0 0.0
  %628 = vmatpush2.msra.mxu0 0.0
  %629 = vmatprep.subr.mxu0 0.0
  %630 = vmatpush2.msra.mxu0 0.0
  %631 = vmatprep.subr.mxu0 0.0
  %632 = vmatpush2.msra.mxu0 0.0
  %633 = vmatprep.subr.mxu0 0.0
  %634 = vmatpush2.msra.mxu0 0.0
  %635 = vmatprep.subr.mxu0 0.0
  %636 = vmatpush2.msra.mxu0 0.0
  %637 = vmatprep.subr.mxu0 0.0
  %638 = vmatpush2.msra.mxu0 0.0
  %639 = vmatprep.subr.mxu0 0.0
  %640 = vmatpush2.msra.mxu0 0.0
  %641 = vmatprep.mubr.f32.mxu0 0.0
  %642 = vmatmul.mubr.f32.gmra.mxu0 %v575
  %v643 = vpop.f32.mrf.mxu0
  %v644 = vadd.f32 %v56, %v643
  %v645 = vpop.f32.mrf.mxu0
  %646 = vdwg.mxu0
  %v647 = vmax.f32 %v644, 0.0
  %v649 = vsel %vm221, %v647, 0
  %651 = vmatprep.subr.mxu0 0.0
  %652 = vmatpush1.msra.mxu0 0.0
  %653 = vmatprep.subr.mxu0 0.0
  %654 = vmatpush1.msra.mxu0 0.0
  %655 = vmatprep.subr.mxu0 0.0
  %656 = vmatpush1.msra.mxu0 0.0
  %657 = vmatprep.subr.mxu0 0.0
  %658 = vmatpush1.msra.mxu0 0.0
  %659 = vmatprep.subr.mxu0 0.0
  %660 = vmatpush1.msra.mxu0 0.0
  %661 = vmatprep.subr.mxu0 0.0
  %662 = vmatpush1.msra.mxu0 0.0
  %663 = vmatprep.subr.mxu0 0.0
  %664 = vmatpush1.msra.mxu0 0.0
  %665 = vmatprep.subr.mxu0 0.0
  %666 = vmatpush1.msra.mxu0 0.0
  %667 = vmatprep.subr.mxu0 0.0
  %668 = vmatpush1.msra.mxu0 0.0
  %669 = vmatprep.subr.mxu0 0.0
  %670 = vmatpush1.msra.mxu0 0.0
  %671 = vmatprep.subr.mxu0 0.0
  %672 = vmatpush1.msra.mxu0 0.0
  %673 = vmatprep.subr.mxu0 0.0
  %674 = vmatpush1.msra.mxu0 0.0
  %675 = vmatprep.subr.mxu0 0.0
  %676 = vmatpush1.msra.mxu0 %v50
  %677 = vmatprep.subr.mxu0 0.0
  %678 = vmatpush1.msra.mxu0 %v49
  %679 = vmatprep.subr.mxu0 0.0
  %680 = vmatpush1.msra.mxu0 %v48
  %681 = vmatprep.subr.mxu0 0.0
  %682 = vmatpush1.msra.mxu0 %v47
  %683 = vmatprep.subr.mxu0 0.0
  %684 = vmatpush2.msra.mxu0 0.0
  %685 = vmatprep.subr.mxu0 0.0
  %686 = vmatpush2.msra.mxu0 0.0
  %687 = vmatprep.subr.mxu0 0.0
  %688 = vmatpush2.msra.mxu0 0.0
  %689 = vmatprep.subr.mxu0 0.0
  %690 = vmatpush2.msra.mxu0 0.0
  %691 = vmatprep.subr.mxu0 0.0
  %692 = vmatpush2.msra.mxu0 0.0
  %693 = vmatprep.subr.mxu0 0.0
  %694 = vmatpush2.msra.mxu0 0.0
  %695 = vmatprep.subr.mxu0 0.0
  %696 = vmatpush2.msra.mxu0 0.0
  %697 = vmatprep.subr.mxu0 0.0
  %698 = vmatpush2.msra.mxu0 0.0
  %699 = vmatprep.subr.mxu0 0.0
  %700 = vmatpush2.msra.mxu0 0.0
  %701 = vmatprep.subr.mxu0 0.0
  %702 = vmatpush2.msra.mxu0 0.0
  %703 = vmatprep.subr.mxu0 0.0
  %704 = vmatpush2.msra.mxu0 0.0
  %705 = vmatprep.subr.mxu0 0.0
  %706 = vmatpush2.msra.mxu0 0.0
  %707 = vmatprep.subr.mxu0 0.0
  %708 = vmatpush2.msra.mxu0 0.0
  %709 = vmatprep.subr.mxu0 0.0
  %710 = vmatpush2.msra.mxu0 0.0
  %711 = vmatprep.subr.mxu0 0.0
  %712 = vmatpush2.msra.mxu0 0.0
  %713 = vmatprep.subr.mxu0 0.0
  %714 = vmatpush2.msra.mxu0 0.0
  %715 = vmatprep.mubr.f32.mxu0 0.0
  %716 = vmatmul.mubr.f32.gmra.mxu0 %v649
  %v717 = vpop.f32.mrf.mxu0
  %v718 = vadd.f32 %v63, %v717
  %v719 = vpop.f32.mrf.mxu0
  %720 = vdwg.mxu0
  %v721 = vtanh.pop %v718
  %v722 = vmul.f32 %v721, 2.0
  %723 = vst [vmem:[%s10 + $0x8] sm:$0xff] %v722
  %v724 = vld [vmem:[#allocation2 + $0x10] sm:$0xff]
  %725 = vmatprep.subr.mxu0 0.0
  %726 = vmatpush1.msra.mxu0 0.0
  %727 = vmatprep.subr.mxu0 0.0
  %728 = vmatpush1.msra.mxu0 0.0
  %729 = vmatprep.subr.mxu0 0.0
  %730 = vmatpush1.msra.mxu0 0.0
  %731 = vmatprep.subr.mxu0 0.0
  %732 = vmatpush1.msra.mxu0 0.0
  %733 = vmatprep.subr.mxu0 0.0
  %734 = vmatpush1.msra.mxu0 0.0
  %735 = vmatprep.subr.mxu0 0.0
  %736 = vmatpush1.msra.mxu0 0.0
  %737 = vmatprep.subr.mxu0 0.0
  %738 = vmatpush1.msra.mxu0 0.0
  %739 = vmatprep.subr.mxu0 0.0
  %740 = vmatpush1.msra.mxu0 0.0
  %741 = vmatprep.subr.mxu0 0.0
  %742 = vmatpush1.msra.mxu0 0.0
  %743 = vmatprep.subr.mxu0 0.0
  %744 = vmatpush1.msra.mxu0 0.0
  %745 = vmatprep.subr.mxu0 0.0
  %746 = vmatpush1.msra.mxu0 0.0
  %747 = vmatprep.subr.mxu0 0.0
  %748 = vmatpush1.msra.mxu0 0.0
  %749 = vmatprep.subr.mxu0 0.0
  %750 = vmatpush1.msra.mxu0 %v42
  %751 = vmatprep.subr.mxu0 0.0
  %752 = vmatpush1.msra.mxu0 %v41
  %753 = vmatprep.subr.mxu0 0.0
  %754 = vmatpush1.msra.mxu0 %v40
  %755 = vmatprep.subr.mxu0 0.0
  %756 = vmatpush1.msra.mxu0 %v39
  %757 = vmatprep.subr.mxu0 0.0
  %758 = vmatpush2.msra.mxu0 0.0
  %759 = vmatprep.subr.mxu0 0.0
  %760 = vmatpush2.msra.mxu0 0.0
  %761 = vmatprep.subr.mxu0 0.0
  %762 = vmatpush2.msra.mxu0 0.0
  %763 = vmatprep.subr.mxu0 0.0
  %764 = vmatpush2.msra.mxu0 0.0
  %765 = vmatprep.subr.mxu0 0.0
  %766 = vmatpush2.msra.mxu0 0.0
  %767 = vmatprep.subr.mxu0 0.0
  %768 = vmatpush2.msra.mxu0 0.0
  %769 = vmatprep.subr.mxu0 0.0
  %770 = vmatpush2.msra.mxu0 0.0
  %771 = vmatprep.subr.mxu0 0.0
  %772 = vmatpush2.msra.mxu0 0.0
  %773 = vmatprep.subr.mxu0 0.0
  %774 = vmatpush2.msra.mxu0 0.0
  %775 = vmatprep.subr.mxu0 0.0
  %776 = vmatpush2.msra.mxu0 0.0
  %777 = vmatprep.subr.mxu0 0.0
  %778 = vmatpush2.msra.mxu0 0.0
  %779 = vmatprep.subr.mxu0 0.0
  %780 = vmatpush2.msra.mxu0 0.0
  %781 = vmatprep.subr.mxu0 0.0
  %782 = vmatpush2.msra.mxu0 0.0
  %783 = vmatprep.subr.mxu0 0.0
  %784 = vmatpush2.msra.mxu0 0.0
  %785 = vmatprep.subr.mxu0 0.0
  %786 = vmatpush2.msra.mxu0 0.0
  %787 = vmatprep.subr.mxu0 0.0
  %788 = vmatpush2.msra.mxu0 0.0
  %789 = vmatprep.mubr.f32.mxu0 0.0
  %790 = vmatmul.mubr.f32.gmra.mxu0 %v575
  %v791 = vpop.f32.mrf.mxu0
  %v792 = vadd.f32 0.0, %v791
  %v793 = vpop.f32.mrf.mxu0
  %794 = vdwg.mxu0
  %v795 = vadd.f32 %v724, %v792
  %v796 = vxor.u32 %v795, 2147483648
  %v797 = vmul.f32 %v796, 1.442695
  %v798 = vpow.pop %v797
  %v799 = vadd.f32 %v798, 1.0
  %v800 = vrcp.pop %v799
  %v801 = vmul.f32 1.0, %v800
  %v802 = vtanh.pop %v795
  %v803 = vmul.f32 %v801, %v565
  %805 = vrot.lane.b32.xlu0 %v802, 64
  %v806 = vpop.permute.xlu0 %805
  %v808 = vmul.f32 %v801, %v806
  %810 = vrot.lane.b32.xlu0 %v808, 32
  %v811 = vpop.permute.xlu0 %810
  %v813 = vadd.f32 %v803, %v811
  %v814 = vtanh.pop %v813
  %816 = vrot.lane.b32.xlu0 %v814, 64
  %v817 = vpop.permute.xlu0 %816
  %v819 = vmul.f32 %v801, %v817
  %821 = vrot.lane.b32.xlu0 %v819, 32
  %v822 = vpop.permute.xlu0 %821
  %v823 = vsel %vm221, %v822, 0
  %825 = vmatprep.subr.mxu0 0.0
  %826 = vmatpush1.msra.mxu0 0.0
  %827 = vmatprep.subr.mxu0 0.0
  %828 = vmatpush1.msra.mxu0 0.0
  %829 = vmatprep.subr.mxu0 0.0
  %830 = vmatpush1.msra.mxu0 0.0
  %831 = vmatprep.subr.mxu0 0.0
  %832 = vmatpush1.msra.mxu0 0.0
  %833 = vmatprep.subr.mxu0 0.0
  %834 = vmatpush1.msra.mxu0 0.0
  %835 = vmatprep.subr.mxu0 0.0
  %836 = vmatpush1.msra.mxu0 0.0
  %837 = vmatprep.subr.mxu0 0.0
  %838 = vmatpush1.msra.mxu0 0.0
  %839 = vmatprep.subr.mxu0 0.0
  %840 = vmatpush1.msra.mxu0 0.0
  %841 = vmatprep.subr.mxu0 0.0
  %842 = vmatpush1.msra.mxu0 0.0
  %843 = vmatprep.subr.mxu0 0.0
  %844 = vmatpush1.msra.mxu0 0.0
  %845 = vmatprep.subr.mxu0 0.0
  %846 = vmatpush1.msra.mxu0 0.0
  %847 = vmatprep.subr.mxu0 0.0
  %848 = vmatpush1.msra.mxu0 0.0
  %849 = vmatprep.subr.mxu0 0.0
  %850 = vmatpush1.msra.mxu0 %v46
  %851 = vmatprep.subr.mxu0 0.0
  %852 = vmatpush1.msra.mxu0 %v45
  %853 = vmatprep.subr.mxu0 0.0
  %854 = vmatpush1.msra.mxu0 %v44
  %855 = vmatprep.subr.mxu0 0.0
  %856 = vmatpush1.msra.mxu0 %v43
  %857 = vmatprep.subr.mxu0 0.0
  %858 = vmatpush2.msra.mxu0 0.0
  %859 = vmatprep.subr.mxu0 0.0
  %860 = vmatpush2.msra.mxu0 0.0
  %861 = vmatprep.subr.mxu0 0.0
  %862 = vmatpush2.msra.mxu0 0.0
  %863 = vmatprep.subr.mxu0 0.0
  %864 = vmatpush2.msra.mxu0 0.0
  %865 = vmatprep.subr.mxu0 0.0
  %866 = vmatpush2.msra.mxu0 0.0
  %867 = vmatprep.subr.mxu0 0.0
  %868 = vmatpush2.msra.mxu0 0.0
  %869 = vmatprep.subr.mxu0 0.0
  %870 = vmatpush2.msra.mxu0 0.0
  %871 = vmatprep.subr.mxu0 0.0
  %872 = vmatpush2.msra.mxu0 0.0
  %873 = vmatprep.subr.mxu0 0.0
  %874 = vmatpush2.msra.mxu0 0.0
  %875 = vmatprep.subr.mxu0 0.0
  %876 = vmatpush2.msra.mxu0 0.0
  %877 = vmatprep.subr.mxu0 0.0
  %878 = vmatpush2.msra.mxu0 0.0
  %879 = vmatprep.subr.mxu0 0.0
  %880 = vmatpush2.msra.mxu0 0.0
  %881 = vmatprep.subr.mxu0 0.0
  %882 = vmatpush2.msra.mxu0 0.0
  %883 = vmatprep.subr.mxu0 0.0
  %884 = vmatpush2.msra.mxu0 0.0
  %885 = vmatprep.subr.mxu0 0.0
  %886 = vmatpush2.msra.mxu0 0.0
  %887 = vmatprep.subr.mxu0 0.0
  %888 = vmatpush2.msra.mxu0 0.0
  %889 = vmatprep.mubr.f32.mxu0 0.0
  %890 = vmatmul.mubr.f32.gmra.mxu0 %v823
  %v891 = vpop.f32.mrf.mxu0
  %v892 = vadd.f32 %v56, %v891
  %v893 = vpop.f32.mrf.mxu0
  %894 = vdwg.mxu0
  %v895 = vmax.f32 %v892, 0.0
  %v897 = vsel %vm221, %v895, 0
  %899 = vmatprep.subr.mxu0 0.0
  %900 = vmatpush1.msra.mxu0 0.0
  %901 = vmatprep.subr.mxu0 0.0
  %902 = vmatpush1.msra.mxu0 0.0
  %903 = vmatprep.subr.mxu0 0.0
  %904 = vmatpush1.msra.mxu0 0.0
  %905 = vmatprep.subr.mxu0 0.0
  %906 = vmatpush1.msra.mxu0 0.0
  %907 = vmatprep.subr.mxu0 0.0
  %908 = vmatpush1.msra.mxu0 0.0
  %909 = vmatprep.subr.mxu0 0.0
  %910 = vmatpush1.msra.mxu0 0.0
  %911 = vmatprep.subr.mxu0 0.0
  %912 = vmatpush1.msra.mxu0 0.0
  %913 = vmatprep.subr.mxu0 0.0
  %914 = vmatpush1.msra.mxu0 0.0
  %915 = vmatprep.subr.mxu0 0.0
  %916 = vmatpush1.msra.mxu0 0.0
  %917 = vmatprep.subr.mxu0 0.0
  %918 = vmatpush1.msra.mxu0 0.0
  %919 = vmatprep.subr.mxu0 0.0
  %920 = vmatpush1.msra.mxu0 0.0
  %921 = vmatprep.subr.mxu0 0.0
  %922 = vmatpush1.msra.mxu0 0.0
  %923 = vmatprep.subr.mxu0 0.0
  %924 = vmatpush1.msra.mxu0 %v50
  %925 = vmatprep.subr.mxu0 0.0
  %926 = vmatpush1.msra.mxu0 %v49
  %927 = vmatprep.subr.mxu0 0.0
  %928 = vmatpush1.msra.mxu0 %v48
  %929 = vmatprep.subr.mxu0 0.0
  %930 = vmatpush1.msra.mxu0 %v47
  %931 = vmatprep.subr.mxu0 0.0
  %932 = vmatpush2.msra.mxu0 0.0
  %933 = vmatprep.subr.mxu0 0.0
  %934 = vmatpush2.msra.mxu0 0.0
  %935 = vmatprep.subr.mxu0 0.0
  %936 = vmatpush2.msra.mxu0 0.0
  %937 = vmatprep.subr.mxu0 0.0
  %938 = vmatpush2.msra.mxu0 0.0
  %939 = vmatprep.subr.mxu0 0.0
  %940 = vmatpush2.msra.mxu0 0.0
  %941 = vmatprep.subr.mxu0 0.0
  %942 = vmatpush2.msra.mxu0 0.0
  %943 = vmatprep.subr.mxu0 0.0
  %944 = vmatpush2.msra.mxu0 0.0
  %945 = vmatprep.subr.mxu0 0.0
  %946 = vmatpush2.msra.mxu0 0.0
  %947 = vmatprep.subr.mxu0 0.0
  %948 = vmatpush2.msra.mxu0 0.0
  %949 = vmatprep.subr.mxu0 0.0
  %950 = vmatpush2.msra.mxu0 0.0
  %951 = vmatprep.subr.mxu0 0.0
  %952 = vmatpush2.msra.mxu0 0.0
  %953 = vmatprep.subr.mxu0 0.0
  %954 = vmatpush2.msra.mxu0 0.0
  %955 = vmatprep.subr.mxu0 0.0
  %956 = vmatpush2.msra.mxu0 0.0
  %957 = vmatprep.subr.mxu0 0.0
  %958 = vmatpush2.msra.mxu0 0.0
  %959 = vmatprep.subr.mxu0 0.0
  %960 = vmatpush2.msra.mxu0 0.0
  %961 = vmatprep.subr.mxu0 0.0
  %962 = vmatpush2.msra.mxu0 0.0
  %963 = vmatprep.mubr.f32.mxu0 0.0
  %964 = vmatmul.mubr.f32.gmra.mxu0 %v897
  %v965 = vpop.f32.mrf.mxu0
  %v966 = vadd.f32 %v63, %v965
  %v967 = vpop.f32.mrf.mxu0
  %968 = vdwg.mxu0
  %v969 = vtanh.pop %v966
  %v970 = vmul.f32 %v969, 2.0
  %971 = vst [vmem:[%s10 + $0x10] sm:$0xff] %v970
  %v972 = vld [vmem:[#allocation2 + $0x18] sm:$0xff]
  %973 = vmatprep.subr.mxu0 0.0
  %974 = vmatpush1.msra.mxu0 0.0
  %975 = vmatprep.subr.mxu0 0.0
  %976 = vmatpush1.msra.mxu0 0.0
  %977 = vmatprep.subr.mxu0 0.0
  %978 = vmatpush1.msra.mxu0 0.0
  %979 = vmatprep.subr.mxu0 0.0
  %980 = vmatpush1.msra.mxu0 0.0
  %981 = vmatprep.subr.mxu0 0.0
  %982 = vmatpush1.msra.mxu0 0.0
  %983 = vmatprep.subr.mxu0 0.0
  %984 = vmatpush1.msra.mxu0 0.0
  %985 = vmatprep.subr.mxu0 0.0
  %986 = vmatpush1.msra.mxu0 0.0
  %987 = vmatprep.subr.mxu0 0.0
  %988 = vmatpush1.msra.mxu0 0.0
  %989 = vmatprep.subr.mxu0 0.0
  %990 = vmatpush1.msra.mxu0 0.0
  %991 = vmatprep.subr.mxu0 0.0
  %992 = vmatpush1.msra.mxu0 0.0
  %993 = vmatprep.subr.mxu0 0.0
  %994 = vmatpush1.msra.mxu0 0.0
  %995 = vmatprep.subr.mxu0 0.0
  %996 = vmatpush1.msra.mxu0 0.0
  %997 = vmatprep.subr.mxu0 0.0
  %998 = vmatpush1.msra.mxu0 %v42
  %999 = vmatprep.subr.mxu0 0.0
  %1000 = vmatpush1.msra.mxu0 %v41
  %1001 = vmatprep.subr.mxu0 0.0
  %1002 = vmatpush1.msra.mxu0 %v40
  %1003 = vmatprep.subr.mxu0 0.0
  %1004 = vmatpush1.msra.mxu0 %v39
  %1005 = vmatprep.subr.mxu0 0.0
  %1006 = vmatpush2.msra.mxu0 0.0
  %1007 = vmatprep.subr.mxu0 0.0
  %1008 = vmatpush2.msra.mxu0 0.0
  %1009 = vmatprep.subr.mxu0 0.0
  %1010 = vmatpush2.msra.mxu0 0.0
  %1011 = vmatprep.subr.mxu0 0.0
  %1012 = vmatpush2.msra.mxu0 0.0
  %1013 = vmatprep.subr.mxu0 0.0
  %1014 = vmatpush2.msra.mxu0 0.0
  %1015 = vmatprep.subr.mxu0 0.0
  %1016 = vmatpush2.msra.mxu0 0.0
  %1017 = vmatprep.subr.mxu0 0.0
  %1018 = vmatpush2.msra.mxu0 0.0
  %1019 = vmatprep.subr.mxu0 0.0
  %1020 = vmatpush2.msra.mxu0 0.0
  %1021 = vmatprep.subr.mxu0 0.0
  %1022 = vmatpush2.msra.mxu0 0.0
  %1023 = vmatprep.subr.mxu0 0.0
  %1024 = vmatpush2.msra.mxu0 0.0
  %1025 = vmatprep.subr.mxu0 0.0
  %1026 = vmatpush2.msra.mxu0 0.0
  %1027 = vmatprep.subr.mxu0 0.0
  %1028 = vmatpush2.msra.mxu0 0.0
  %1029 = vmatprep.subr.mxu0 0.0
  %1030 = vmatpush2.msra.mxu0 0.0
  %1031 = vmatprep.subr.mxu0 0.0
  %1032 = vmatpush2.msra.mxu0 0.0
  %1033 = vmatprep.subr.mxu0 0.0
  %1034 = vmatpush2.msra.mxu0 0.0
  %1035 = vmatprep.subr.mxu0 0.0
  %1036 = vmatpush2.msra.mxu0 0.0
  %1037 = vmatprep.mubr.f32.mxu0 0.0
  %1038 = vmatmul.mubr.f32.gmra.mxu0 %v823
  %v1039 = vpop.f32.mrf.mxu0
  %v1040 = vadd.f32 0.0, %v1039
  %v1041 = vpop.f32.mrf.mxu0
  %1042 = vdwg.mxu0
  %v1043 = vadd.f32 %v972, %v1040
  %v1044 = vxor.u32 %v1043, 2147483648
  %v1045 = vmul.f32 %v1044, 1.442695
  %v1046 = vpow.pop %v1045
  %v1047 = vadd.f32 %v1046, 1.0
  %v1048 = vrcp.pop %v1047
  %v1049 = vmul.f32 1.0, %v1048
  %v1050 = vtanh.pop %v1043
  %v1051 = vmul.f32 %v1049, %v813
  %1053 = vrot.lane.b32.xlu0 %v1050, 64
  %v1054 = vpop.permute.xlu0 %1053
  %v1056 = vmul.f32 %v1049, %v1054
  %1058 = vrot.lane.b32.xlu0 %v1056, 32
  %v1059 = vpop.permute.xlu0 %1058
  %v1061 = vadd.f32 %v1051, %v1059
  %v1062 = vtanh.pop %v1061
  %1064 = vrot.lane.b32.xlu0 %v1062, 64
  %v1065 = vpop.permute.xlu0 %1064
  %v1067 = vmul.f32 %v1049, %v1065
  %1069 = vrot.lane.b32.xlu0 %v1067, 32
  %v1070 = vpop.permute.xlu0 %1069
  %v1071 = vsel %vm221, %v1070, 0
  %1073 = vmatprep.subr.mxu0 0.0
  %1074 = vmatpush1.msra.mxu0 0.0
  %1075 = vmatprep.subr.mxu0 0.0
  %1076 = vmatpush1.msra.mxu0 0.0
  %1077 = vmatprep.subr.mxu0 0.0
  %1078 = vmatpush1.msra.mxu0 0.0
  %1079 = vmatprep.subr.mxu0 0.0
  %1080 = vmatpush1.msra.mxu0 0.0
  %1081 = vmatprep.subr.mxu0 0.0
  %1082 = vmatpush1.msra.mxu0 0.0
  %1083 = vmatprep.subr.mxu0 0.0
  %1084 = vmatpush1.msra.mxu0 0.0
  %1085 = vmatprep.subr.mxu0 0.0
  %1086 = vmatpush1.msra.mxu0 0.0
  %1087 = vmatprep.subr.mxu0 0.0
  %1088 = vmatpush1.msra.mxu0 0.0
  %1089 = vmatprep.subr.mxu0 0.0
  %1090 = vmatpush1.msra.mxu0 0.0
  %1091 = vmatprep.subr.mxu0 0.0
  %1092 = vmatpush1.msra.mxu0 0.0
  %1093 = vmatprep.subr.mxu0 0.0
  %1094 = vmatpush1.msra.mxu0 0.0
  %1095 = vmatprep.subr.mxu0 0.0
  %1096 = vmatpush1.msra.mxu0 0.0
  %1097 = vmatprep.subr.mxu0 0.0
  %1098 = vmatpush1.msra.mxu0 %v46
  %1099 = vmatprep.subr.mxu0 0.0
  %1100 = vmatpush1.msra.mxu0 %v45
  %1101 = vmatprep.subr.mxu0 0.0
  %1102 = vmatpush1.msra.mxu0 %v44
  %1103 = vmatprep.subr.mxu0 0.0
  %1104 = vmatpush1.msra.mxu0 %v43
  %1105 = vmatprep.subr.mxu0 0.0
  %1106 = vmatpush2.msra.mxu0 0.0
  %1107 = vmatprep.subr.mxu0 0.0
  %1108 = vmatpush2.msra.mxu0 0.0
  %1109 = vmatprep.subr.mxu0 0.0
  %1110 = vmatpush2.msra.mxu0 0.0
  %1111 = vmatprep.subr.mxu0 0.0
  %1112 = vmatpush2.msra.mxu0 0.0
  %1113 = vmatprep.subr.mxu0 0.0
  %1114 = vmatpush2.msra.mxu0 0.0
  %1115 = vmatprep.subr.mxu0 0.0
  %1116 = vmatpush2.msra.mxu0 0.0
  %1117 = vmatprep.subr.mxu0 0.0
  %1118 = vmatpush2.msra.mxu0 0.0
  %1119 = vmatprep.subr.mxu0 0.0
  %1120 = vmatpush2.msra.mxu0 0.0
  %1121 = vmatprep.subr.mxu0 0.0
  %1122 = vmatpush2.msra.mxu0 0.0
  %1123 = vmatprep.subr.mxu0 0.0
  %1124 = vmatpush2.msra.mxu0 0.0
  %1125 = vmatprep.subr.mxu0 0.0
  %1126 = vmatpush2.msra.mxu0 0.0
  %1127 = vmatprep.subr.mxu0 0.0
  %1128 = vmatpush2.msra.mxu0 0.0
  %1129 = vmatprep.subr.mxu0 0.0
  %1130 = vmatpush2.msra.mxu0 0.0
  %1131 = vmatprep.subr.mxu0 0.0
  %1132 = vmatpush2.msra.mxu0 0.0
  %1133 = vmatprep.subr.mxu0 0.0
  %1134 = vmatpush2.msra.mxu0 0.0
  %1135 = vmatprep.subr.mxu0 0.0
  %1136 = vmatpush2.msra.mxu0 0.0
  %1137 = vmatprep.mubr.f32.mxu0 0.0
  %1138 = vmatmul.mubr.f32.gmra.mxu0 %v1071
  %v1139 = vpop.f32.mrf.mxu0
  %v1140 = vadd.f32 %v56, %v1139
  %v1141 = vpop.f32.mrf.mxu0
  %1142 = vdwg.mxu0
  %v1143 = vmax.f32 %v1140, 0.0
  %v1145 = vsel %vm221, %v1143, 0
  %1147 = vmatprep.subr.mxu0 0.0
  %1148 = vmatpush1.msra.mxu0 0.0
  %1149 = vmatprep.subr.mxu0 0.0
  %1150 = vmatpush1.msra.mxu0 0.0
  %1151 = vmatprep.subr.mxu0 0.0
  %1152 = vmatpush1.msra.mxu0 0.0
  %1153 = vmatprep.subr.mxu0 0.0
  %1154 = vmatpush1.msra.mxu0 0.0
  %1155 = vmatprep.subr.mxu0 0.0
  %1156 = vmatpush1.msra.mxu0 0.0
  %1157 = vmatprep.subr.mxu0 0.0
  %1158 = vmatpush1.msra.mxu0 0.0
  %1159 = vmatprep.subr.mxu0 0.0
  %1160 = vmatpush1.msra.mxu0 0.0
  %1161 = vmatprep.subr.mxu0 0.0
  %1162 = vmatpush1.msra.mxu0 0.0
  %1163 = vmatprep.subr.mxu0 0.0
  %1164 = vmatpush1.msra.mxu0 0.0
  %1165 = vmatprep.subr.mxu0 0.0
  %1166 = vmatpush1.msra.mxu0 0.0
  %1167 = vmatprep.subr.mxu0 0.0
  %1168 = vmatpush1.msra.mxu0 0.0
  %1169 = vmatprep.subr.mxu0 0.0
  %1170 = vmatpush1.msra.mxu0 0.0
  %1171 = vmatprep.subr.mxu0 0.0
  %1172 = vmatpush1.msra.mxu0 %v50
  %1173 = vmatprep.subr.mxu0 0.0
  %1174 = vmatpush1.msra.mxu0 %v49
  %1175 = vmatprep.subr.mxu0 0.0
  %1176 = vmatpush1.msra.mxu0 %v48
  %1177 = vmatprep.subr.mxu0 0.0
  %1178 = vmatpush1.msra.mxu0 %v47
  %1179 = vmatprep.subr.mxu0 0.0
  %1180 = vmatpush2.msra.mxu0 0.0
  %1181 = vmatprep.subr.mxu0 0.0
  %1182 = vmatpush2.msra.mxu0 0.0
  %1183 = vmatprep.subr.mxu0 0.0
  %1184 = vmatpush2.msra.mxu0 0.0
  %1185 = vmatprep.subr.mxu0 0.0
  %1186 = vmatpush2.msra.mxu0 0.0
  %1187 = vmatprep.subr.mxu0 0.0
  %1188 = vmatpush2.msra.mxu0 0.0
  %1189 = vmatprep.subr.mxu0 0.0
  %1190 = vmatpush2.msra.mxu0 0.0
  %1191 = vmatprep.subr.mxu0 0.0
  %1192 = vmatpush2.msra.mxu0 0.0
  %1193 = vmatprep.subr.mxu0 0.0
  %1194 = vmatpush2.msra.mxu0 0.0
  %1195 = vmatprep.subr.mxu0 0.0
  %1196 = vmatpush2.msra.mxu0 0.0
  %1197 = vmatprep.subr.mxu0 0.0
  %1198 = vmatpush2.msra.mxu0 0.0
  %1199 = vmatprep.subr.mxu0 0.0
  %1200 = vmatpush2.msra.mxu0 0.0
  %1201 = vmatprep.subr.mxu0 0.0
  %1202 = vmatpush2.msra.mxu0 0.0
  %1203 = vmatprep.subr.mxu0 0.0
  %1204 = vmatpush2.msra.mxu0 0.0
  %1205 = vmatprep.subr.mxu0 0.0
  %1206 = vmatpush2.msra.mxu0 0.0
  %1207 = vmatprep.subr.mxu0 0.0
  %1208 = vmatpush2.msra.mxu0 0.0
  %1209 = vmatprep.subr.mxu0 0.0
  %1210 = vmatpush2.msra.mxu0 0.0
  %1211 = vmatprep.mubr.f32.mxu0 0.0
  %1212 = vmatmul.mubr.f32.gmra.mxu0 %v1145
  %v1213 = vpop.f32.mrf.mxu0
  %v1214 = vadd.f32 %v63, %v1213
  %v1215 = vpop.f32.mrf.mxu0
  %1216 = vdwg.mxu0
  %v1217 = vtanh.pop %v1214
  %v1218 = vmul.f32 %v1217, 2.0
  %1219 = vst [vmem:[%s10 + $0x18] sm:$0xff] %v1218
  %v1220 = vld [vmem:[#allocation2 + $0x20] sm:$0xff]
  %1221 = vmatprep.subr.mxu0 0.0
  %1222 = vmatpush1.msra.mxu0 0.0
  %1223 = vmatprep.subr.mxu0 0.0
  %1224 = vmatpush1.msra.mxu0 0.0
  %1225 = vmatprep.subr.mxu0 0.0
  %1226 = vmatpush1.msra.mxu0 0.0
  %1227 = vmatprep.subr.mxu0 0.0
  %1228 = vmatpush1.msra.mxu0 0.0
  %1229 = vmatprep.subr.mxu0 0.0
  %1230 = vmatpush1.msra.mxu0 0.0
  %1231 = vmatprep.subr.mxu0 0.0
  %1232 = vmatpush1.msra.mxu0 0.0
  %1233 = vmatprep.subr.mxu0 0.0
  %1234 = vmatpush1.msra.mxu0 0.0
  %1235 = vmatprep.subr.mxu0 0.0
  %1236 = vmatpush1.msra.mxu0 0.0
  %1237 = vmatprep.subr.mxu0 0.0
  %1238 = vmatpush1.msra.mxu0 0.0
  %1239 = vmatprep.subr.mxu0 0.0
  %1240 = vmatpush1.msra.mxu0 0.0
  %1241 = vmatprep.subr.mxu0 0.0
  %1242 = vmatpush1.msra.mxu0 0.0
  %1243 = vmatprep.subr.mxu0 0.0
  %1244 = vmatpush1.msra.mxu0 0.0
  %1245 = vmatprep.subr.mxu0 0.0
  %1246 = vmatpush1.msra.mxu0 %v42
  %1247 = vmatprep.subr.mxu0 0.0
  %1248 = vmatpush1.msra.mxu0 %v41
  %1249 = vmatprep.subr.mxu0 0.0
  %1250 = vmatpush1.msra.mxu0 %v40
  %1251 = vmatprep.subr.mxu0 0.0
  %1252 = vmatpush1.msra.mxu0 %v39
  %1253 = vmatprep.subr.mxu0 0.0
  %1254 = vmatpush2.msra.mxu0 0.0
  %1255 = vmatprep.subr.mxu0 0.0
  %1256 = vmatpush2.msra.mxu0 0.0
  %1257 = vmatprep.subr.mxu0 0.0
  %1258 = vmatpush2.msra.mxu0 0.0
  %1259 = vmatprep.subr.mxu0 0.0
  %1260 = vmatpush2.msra.mxu0 0.0
  %1261 = vmatprep.subr.mxu0 0.0
  %1262 = vmatpush2.msra.mxu0 0.0
  %1263 = vmatprep.subr.mxu0 0.0
  %1264 = vmatpush2.msra.mxu0 0.0
  %1265 = vmatprep.subr.mxu0 0.0
  %1266 = vmatpush2.msra.mxu0 0.0
  %1267 = vmatprep.subr.mxu0 0.0
  %1268 = vmatpush2.msra.mxu0 0.0
  %1269 = vmatprep.subr.mxu0 0.0
  %1270 = vmatpush2.msra.mxu0 0.0
  %1271 = vmatprep.subr.mxu0 0.0
  %1272 = vmatpush2.msra.mxu0 0.0
  %1273 = vmatprep.subr.mxu0 0.0
  %1274 = vmatpush2.msra.mxu0 0.0
  %1275 = vmatprep.subr.mxu0 0.0
  %1276 = vmatpush2.msra.mxu0 0.0
  %1277 = vmatprep.subr.mxu0 0.0
  %1278 = vmatpush2.msra.mxu0 0.0
  %1279 = vmatprep.subr.mxu0 0.0
  %1280 = vmatpush2.msra.mxu0 0.0
  %1281 = vmatprep.subr.mxu0 0.0
  %1282 = vmatpush2.msra.mxu0 0.0
  %1283 = vmatprep.subr.mxu0 0.0
  %1284 = vmatpush2.msra.mxu0 0.0
  %1285 = vmatprep.mubr.f32.mxu0 0.0
  %1286 = vmatmul.mubr.f32.gmra.mxu0 %v1071
  %v1287 = vpop.f32.mrf.mxu0
  %v1288 = vadd.f32 0.0, %v1287
  %v1289 = vpop.f32.mrf.mxu0
  %1290 = vdwg.mxu0
  %v1291 = vadd.f32 %v1220, %v1288
  %v1292 = vxor.u32 %v1291, 2147483648
  %v1293 = vmul.f32 %v1292, 1.442695
  %v1294 = vpow.pop %v1293
  %v1295 = vadd.f32 %v1294, 1.0
  %v1296 = vrcp.pop %v1295
  %v1297 = vmul.f32 1.0, %v1296
  %v1298 = vtanh.pop %v1291
  %v1299 = vmul.f32 %v1297, %v1061
  %1301 = vrot.lane.b32.xlu0 %v1298, 64
  %v1302 = vpop.permute.xlu0 %1301
  %v1304 = vmul.f32 %v1297, %v1302
  %1306 = vrot.lane.b32.xlu0 %v1304, 32
  %v1307 = vpop.permute.xlu0 %1306
  %v1309 = vadd.f32 %v1299, %v1307
  %v1310 = vtanh.pop %v1309
  %1312 = vrot.lane.b32.xlu0 %v1310, 64
  %v1313 = vpop.permute.xlu0 %1312
  %v1315 = vmul.f32 %v1297, %v1313
  %1317 = vrot.lane.b32.xlu0 %v1315, 32
  %v1318 = vpop.permute.xlu0 %1317
  %v1319 = vsel %vm221, %v1318, 0
  %1321 = vmatprep.subr.mxu0 0.0
  %1322 = vmatpush1.msra.mxu0 0.0
  %1323 = vmatprep.subr.mxu0 0.0
  %1324 = vmatpush1.msra.mxu0 0.0
  %1325 = vmatprep.subr.mxu0 0.0
  %1326 = vmatpush1.msra.mxu0 0.0
  %1327 = vmatprep.subr.mxu0 0.0
  %1328 = vmatpush1.msra.mxu0 0.0
  %1329 = vmatprep.subr.mxu0 0.0
  %1330 = vmatpush1.msra.mxu0 0.0
  %1331 = vmatprep.subr.mxu0 0.0
  %1332 = vmatpush1.msra.mxu0 0.0
  %1333 = vmatprep.subr.mxu0 0.0
  %1334 = vmatpush1.msra.mxu0 0.0
  %1335 = vmatprep.subr.mxu0 0.0
  %1336 = vmatpush1.msra.mxu0 0.0
  %1337 = vmatprep.subr.mxu0 0.0
  %1338 = vmatpush1.msra.mxu0 0.0
  %1339 = vmatprep.subr.mxu0 0.0
  %1340 = vmatpush1.msra.mxu0 0.0
  %1341 = vmatprep.subr.mxu0 0.0
  %1342 = vmatpush1.msra.mxu0 0.0
  %1343 = vmatprep.subr.mxu0 0.0
  %1344 = vmatpush1.msra.mxu0 0.0
  %1345 = vmatprep.subr.mxu0 0.0
  %1346 = vmatpush1.msra.mxu0 %v46
  %1347 = vmatprep.subr.mxu0 0.0
  %1348 = vmatpush1.msra.mxu0 %v45
  %1349 = vmatprep.subr.mxu0 0.0
  %1350 = vmatpush1.msra.mxu0 %v44
  %1351 = vmatprep.subr.mxu0 0.0
  %1352 = vmatpush1.msra.mxu0 %v43
  %1353 = vmatprep.subr.mxu0 0.0
  %1354 = vmatpush2.msra.mxu0 0.0
  %1355 = vmatprep.subr.mxu0 0.0
  %1356 = vmatpush2.msra.mxu0 0.0
  %1357 = vmatprep.subr.mxu0 0.0
  %1358 = vmatpush2.msra.mxu0 0.0
  %1359 = vmatprep.subr.mxu0 0.0
  %1360 = vmatpush2.msra.mxu0 0.0
  %1361 = vmatprep.subr.mxu0 0.0
  %1362 = vmatpush2.msra.mxu0 0.0
  %1363 = vmatprep.subr.mxu0 0.0
  %1364 = vmatpush2.msra.mxu0 0.0
  %1365 = vmatprep.subr.mxu0 0.0
  %1366 = vmatpush2.msra.mxu0 0.0
  %1367 = vmatprep.subr.mxu0 0.0
  %1368 = vmatpush2.msra.mxu0 0.0
  %1369 = vmatprep.subr.mxu0 0.0
  %1370 = vmatpush2.msra.mxu0 0.0
  %1371 = vmatprep.subr.mxu0 0.0
  %1372 = vmatpush2.msra.mxu0 0.0
  %1373 = vmatprep.subr.mxu0 0.0
  %1374 = vmatpush2.msra.mxu0 0.0
  %1375 = vmatprep.subr.mxu0 0.0
  %1376 = vmatpush2.msra.mxu0 0.0
  %1377 = vmatprep.subr.mxu0 0.0
  %1378 = vmatpush2.msra.mxu0 0.0
  %1379 = vmatprep.subr.mxu0 0.0
  %1380 = vmatpush2.msra.mxu0 0.0
  %1381 = vmatprep.subr.mxu0 0.0
  %1382 = vmatpush2.msra.mxu0 0.0
  %1383 = vmatprep.subr.mxu0 0.0
  %1384 = vmatpush2.msra.mxu0 0.0
  %1385 = vmatprep.mubr.f32.mxu0 0.0
  %1386 = vmatmul.mubr.f32.gmra.mxu0 %v1319
  %v1387 = vpop.f32.mrf.mxu0
  %v1388 = vadd.f32 %v56, %v1387
  %v1389 = vpop.f32.mrf.mxu0
  %1390 = vdwg.mxu0
  %v1391 = vmax.f32 %v1388, 0.0
  %v1393 = vsel %vm221, %v1391, 0
  %1395 = vmatprep.subr.mxu0 0.0
  %1396 = vmatpush1.msra.mxu0 0.0
  %1397 = vmatprep.subr.mxu0 0.0
  %1398 = vmatpush1.msra.mxu0 0.0
  %1399 = vmatprep.subr.mxu0 0.0
  %1400 = vmatpush1.msra.mxu0 0.0
  %1401 = vmatprep.subr.mxu0 0.0
  %1402 = vmatpush1.msra.mxu0 0.0
  %1403 = vmatprep.subr.mxu0 0.0
  %1404 = vmatpush1.msra.mxu0 0.0
  %1405 = vmatprep.subr.mxu0 0.0
  %1406 = vmatpush1.msra.mxu0 0.0
  %1407 = vmatprep.subr.mxu0 0.0
  %1408 = vmatpush1.msra.mxu0 0.0
  %1409 = vmatprep.subr.mxu0 0.0
  %1410 = vmatpush1.msra.mxu0 0.0
  %1411 = vmatprep.subr.mxu0 0.0
  %1412 = vmatpush1.msra.mxu0 0.0
  %1413 = vmatprep.subr.mxu0 0.0
  %1414 = vmatpush1.msra.mxu0 0.0
  %1415 = vmatprep.subr.mxu0 0.0
  %1416 = vmatpush1.msra.mxu0 0.0
  %1417 = vmatprep.subr.mxu0 0.0
  %1418 = vmatpush1.msra.mxu0 0.0
  %1419 = vmatprep.subr.mxu0 0.0
  %1420 = vmatpush1.msra.mxu0 %v50
  %1421 = vmatprep.subr.mxu0 0.0
  %1422 = vmatpush1.msra.mxu0 %v49
  %1423 = vmatprep.subr.mxu0 0.0
  %1424 = vmatpush1.msra.mxu0 %v48
  %1425 = vmatprep.subr.mxu0 0.0
  %1426 = vmatpush1.msra.mxu0 %v47
  %1427 = vmatprep.subr.mxu0 0.0
  %1428 = vmatpush2.msra.mxu0 0.0
  %1429 = vmatprep.subr.mxu0 0.0
  %1430 = vmatpush2.msra.mxu0 0.0
  %1431 = vmatprep.subr.mxu0 0.0
  %1432 = vmatpush2.msra.mxu0 0.0
  %1433 = vmatprep.subr.mxu0 0.0
  %1434 = vmatpush2.msra.mxu0 0.0
  %1435 = vmatprep.subr.mxu0 0.0
  %1436 = vmatpush2.msra.mxu0 0.0
  %1437 = vmatprep.subr.mxu0 0.0
  %1438 = vmatpush2.msra.mxu0 0.0
  %1439 = vmatprep.subr.mxu0 0.0
  %1440 = vmatpush2.msra.mxu0 0.0
  %1441 = vmatprep.subr.mxu0 0.0
  %1442 = vmatpush2.msra.mxu0 0.0
  %1443 = vmatprep.subr.mxu0 0.0
  %1444 = vmatpush2.msra.mxu0 0.0
  %1445 = vmatprep.subr.mxu0 0.0
  %1446 = vmatpush2.msra.mxu0 0.0
  %1447 = vmatprep.subr.mxu0 0.0
  %1448 = vmatpush2.msra.mxu0 0.0
  %1449 = vmatprep.subr.mxu0 0.0
  %1450 = vmatpush2.msra.mxu0 0.0
  %1451 = vmatprep.subr.mxu0 0.0
  %1452 = vmatpush2.msra.mxu0 0.0
  %1453 = vmatprep.subr.mxu0 0.0
  %1454 = vmatpush2.msra.mxu0 0.0
  %1455 = vmatprep.subr.mxu0 0.0
  %1456 = vmatpush2.msra.mxu0 0.0
  %1457 = vmatprep.subr.mxu0 0.0
  %1458 = vmatpush2.msra.mxu0 0.0
  %1459 = vmatprep.mubr.f32.mxu0 0.0
  %1460 = vmatmul.mubr.f32.gmra.mxu0 %v1393
  %v1461 = vpop.f32.mrf.mxu0
  %v1462 = vadd.f32 %v63, %v1461
  %v1463 = vpop.f32.mrf.mxu0
  %1464 = vdwg.mxu0
  %v1465 = vtanh.pop %v1462
  %v1466 = vmul.f32 %v1465, 2.0
  %1467 = vst [vmem:[%s10 + $0x20] sm:$0xff] %v1466
  %v1468 = vld [vmem:[#allocation2 + $0x28] sm:$0xff]
  %1469 = vmatprep.subr.mxu0 0.0
  %1470 = vmatpush1.msra.mxu0 0.0
  %1471 = vmatprep.subr.mxu0 0.0
  %1472 = vmatpush1.msra.mxu0 0.0
  %1473 = vmatprep.subr.mxu0 0.0
  %1474 = vmatpush1.msra.mxu0 0.0
  %1475 = vmatprep.subr.mxu0 0.0
  %1476 = vmatpush1.msra.mxu0 0.0
  %1477 = vmatprep.subr.mxu0 0.0
  %1478 = vmatpush1.msra.mxu0 0.0
  %1479 = vmatprep.subr.mxu0 0.0
  %1480 = vmatpush1.msra.mxu0 0.0
  %1481 = vmatprep.subr.mxu0 0.0
  %1482 = vmatpush1.msra.mxu0 0.0
  %1483 = vmatprep.subr.mxu0 0.0
  %1484 = vmatpush1.msra.mxu0 0.0
  %1485 = vmatprep.subr.mxu0 0.0
  %1486 = vmatpush1.msra.mxu0 0.0
  %1487 = vmatprep.subr.mxu0 0.0
  %1488 = vmatpush1.msra.mxu0 0.0
  %1489 = vmatprep.subr.mxu0 0.0
  %1490 = vmatpush1.msra.mxu0 0.0
  %1491 = vmatprep.subr.mxu0 0.0
  %1492 = vmatpush1.msra.mxu0 0.0
  %1493 = vmatprep.subr.mxu0 0.0
  %1494 = vmatpush1.msra.mxu0 %v42
  %1495 = vmatprep.subr.mxu0 0.0
  %1496 = vmatpush1.msra.mxu0 %v41
  %1497 = vmatprep.subr.mxu0 0.0
  %1498 = vmatpush1.msra.mxu0 %v40
  %1499 = vmatprep.subr.mxu0 0.0
  %1500 = vmatpush1.msra.mxu0 %v39
  %1501 = vmatprep.subr.mxu0 0.0
  %1502 = vmatpush2.msra.mxu0 0.0
  %1503 = vmatprep.subr.mxu0 0.0
  %1504 = vmatpush2.msra.mxu0 0.0
  %1505 = vmatprep.subr.mxu0 0.0
  %1506 = vmatpush2.msra.mxu0 0.0
  %1507 = vmatprep.subr.mxu0 0.0
  %1508 = vmatpush2.msra.mxu0 0.0
  %1509 = vmatprep.subr.mxu0 0.0
  %1510 = vmatpush2.msra.mxu0 0.0
  %1511 = vmatprep.subr.mxu0 0.0
  %1512 = vmatpush2.msra.mxu0 0.0
  %1513 = vmatprep.subr.mxu0 0.0
  %1514 = vmatpush2.msra.mxu0 0.0
  %1515 = vmatprep.subr.mxu0 0.0
  %1516 = vmatpush2.msra.mxu0 0.0
  %1517 = vmatprep.subr.mxu0 0.0
  %1518 = vmatpush2.msra.mxu0 0.0
  %1519 = vmatprep.subr.mxu0 0.0
  %1520 = vmatpush2.msra.mxu0 0.0
  %1521 = vmatprep.subr.mxu0 0.0
  %1522 = vmatpush2.msra.mxu0 0.0
  %1523 = vmatprep.subr.mxu0 0.0
  %1524 = vmatpush2.msra.mxu0 0.0
  %1525 = vmatprep.subr.mxu0 0.0
  %1526 = vmatpush2.msra.mxu0 0.0
  %1527 = vmatprep.subr.mxu0 0.0
  %1528 = vmatpush2.msra.mxu0 0.0
  %1529 = vmatprep.subr.mxu0 0.0
  %1530 = vmatpush2.msra.mxu0 0.0
  %1531 = vmatprep.subr.mxu0 0.0
  %1532 = vmatpush2.msra.mxu0 0.0
  %1533 = vmatprep.mubr.f32.mxu0 0.0
  %1534 = vmatmul.mubr.f32.gmra.mxu0 %v1319
  %v1535 = vpop.f32.mrf.mxu0
  %v1536 = vadd.f32 0.0, %v1535
  %v1537 = vpop.f32.mrf.mxu0
  %1538 = vdwg.mxu0
  %v1539 = vadd.f32 %v1468, %v1536
  %v1540 = vxor.u32 %v1539, 2147483648
  %v1541 = vmul.f32 %v1540, 1.442695
  %v1542 = vpow.pop %v1541
  %v1543 = vadd.f32 %v1542, 1.0
  %v1544 = vrcp.pop %v1543
  %v1545 = vmul.f32 1.0, %v1544
  %v1546 = vtanh.pop %v1539
  %v1547 = vmul.f32 %v1545, %v1309
  %1549 = vrot.lane.b32.xlu0 %v1546, 64
  %v1550 = vpop.permute.xlu0 %1549
  %v1552 = vmul.f32 %v1545, %v1550
  %1554 = vrot.lane.b32.xlu0 %v1552, 32
  %v1555 = vpop.permute.xlu0 %1554
  %v1557 = vadd.f32 %v1547, %v1555
  %v1558 = vtanh.pop %v1557
  %1560 = vrot.lane.b32.xlu0 %v1558, 64
  %v1561 = vpop.permute.xlu0 %1560
  %v1563 = vmul.f32 %v1545, %v1561
  %1565 = vrot.lane.b32.xlu0 %v1563, 32
  %v1566 = vpop.permute.xlu0 %1565
  %v1567 = vsel %vm221, %v1566, 0
  %1569 = vmatprep.subr.mxu0 0.0
  %1570 = vmatpush1.msra.mxu0 0.0
  %1571 = vmatprep.subr.mxu0 0.0
  %1572 = vmatpush1.msra.mxu0 0.0
  %1573 = vmatprep.subr.mxu0 0.0
  %1574 = vmatpush1.msra.mxu0 0.0
  %1575 = vmatprep.subr.mxu0 0.0
  %1576 = vmatpush1.msra.mxu0 0.0
  %1577 = vmatprep.subr.mxu0 0.0
  %1578 = vmatpush1.msra.mxu0 0.0
  %1579 = vmatprep.subr.mxu0 0.0
  %1580 = vmatpush1.msra.mxu0 0.0
  %1581 = vmatprep.subr.mxu0 0.0
  %1582 = vmatpush1.msra.mxu0 0.0
  %1583 = vmatprep.subr.mxu0 0.0
  %1584 = vmatpush1.msra.mxu0 0.0
  %1585 = vmatprep.subr.mxu0 0.0
  %1586 = vmatpush1.msra.mxu0 0.0
  %1587 = vmatprep.subr.mxu0 0.0
  %1588 = vmatpush1.msra.mxu0 0.0
  %1589 = vmatprep.subr.mxu0 0.0
  %1590 = vmatpush1.msra.mxu0 0.0
  %1591 = vmatprep.subr.mxu0 0.0
  %1592 = vmatpush1.msra.mxu0 0.0
  %1593 = vmatprep.subr.mxu0 0.0
  %1594 = vmatpush1.msra.mxu0 %v46
  %1595 = vmatprep.subr.mxu0 0.0
  %1596 = vmatpush1.msra.mxu0 %v45
  %1597 = vmatprep.subr.mxu0 0.0
  %1598 = vmatpush1.msra.mxu0 %v44
  %1599 = vmatprep.subr.mxu0 0.0
  %1600 = vmatpush1.msra.mxu0 %v43
  %1601 = vmatprep.subr.mxu0 0.0
  %1602 = vmatpush2.msra.mxu0 0.0
  %1603 = vmatprep.subr.mxu0 0.0
  %1604 = vmatpush2.msra.mxu0 0.0
  %1605 = vmatprep.subr.mxu0 0.0
  %1606 = vmatpush2.msra.mxu0 0.0
  %1607 = vmatprep.subr.mxu0 0.0
  %1608 = vmatpush2.msra.mxu0 0.0
  %1609 = vmatprep.subr.mxu0 0.0
  %1610 = vmatpush2.msra.mxu0 0.0
  %1611 = vmatprep.subr.mxu0 0.0
  %1612 = vmatpush2.msra.mxu0 0.0
  %1613 = vmatprep.subr.mxu0 0.0
  %1614 = vmatpush2.msra.mxu0 0.0
  %1615 = vmatprep.subr.mxu0 0.0
  %1616 = vmatpush2.msra.mxu0 0.0
  %1617 = vmatprep.subr.mxu0 0.0
  %1618 = vmatpush2.msra.mxu0 0.0
  %1619 = vmatprep.subr.mxu0 0.0
  %1620 = vmatpush2.msra.mxu0 0.0
  %1621 = vmatprep.subr.mxu0 0.0
  %1622 = vmatpush2.msra.mxu0 0.0
  %1623 = vmatprep.subr.mxu0 0.0
  %1624 = vmatpush2.msra.mxu0 0.0
  %1625 = vmatprep.subr.mxu0 0.0
  %1626 = vmatpush2.msra.mxu0 0.0
  %1627 = vmatprep.subr.mxu0 0.0
  %1628 = vmatpush2.msra.mxu0 0.0
  %1629 = vmatprep.subr.mxu0 0.0
  %1630 = vmatpush2.msra.mxu0 0.0
  %1631 = vmatprep.subr.mxu0 0.0
  %1632 = vmatpush2.msra.mxu0 0.0
  %1633 = vmatprep.mubr.f32.mxu0 0.0
  %1634 = vmatmul.mubr.f32.gmra.mxu0 %v1567
  %v1635 = vpop.f32.mrf.mxu0
  %v1636 = vadd.f32 %v56, %v1635
  %v1637 = vpop.f32.mrf.mxu0
  %1638 = vdwg.mxu0
  %v1639 = vmax.f32 %v1636, 0.0
  %v1641 = vsel %vm221, %v1639, 0
  %1643 = vmatprep.subr.mxu0 0.0
  %1644 = vmatpush1.msra.mxu0 0.0
  %1645 = vmatprep.subr.mxu0 0.0
  %1646 = vmatpush1.msra.mxu0 0.0
  %1647 = vmatprep.subr.mxu0 0.0
  %1648 = vmatpush1.msra.mxu0 0.0
  %1649 = vmatprep.subr.mxu0 0.0
  %1650 = vmatpush1.msra.mxu0 0.0
  %1651 = vmatprep.subr.mxu0 0.0
  %1652 = vmatpush1.msra.mxu0 0.0
  %1653 = vmatprep.subr.mxu0 0.0
  %1654 = vmatpush1.msra.mxu0 0.0
  %1655 = vmatprep.subr.mxu0 0.0
  %1656 = vmatpush1.msra.mxu0 0.0
  %1657 = vmatprep.subr.mxu0 0.0
  %1658 = vmatpush1.msra.mxu0 0.0
  %1659 = vmatprep.subr.mxu0 0.0
  %1660 = vmatpush1.msra.mxu0 0.0
  %1661 = vmatprep.subr.mxu0 0.0
  %1662 = vmatpush1.msra.mxu0 0.0
  %1663 = vmatprep.subr.mxu0 0.0
  %1664 = vmatpush1.msra.mxu0 0.0
  %1665 = vmatprep.subr.mxu0 0.0
  %1666 = vmatpush1.msra.mxu0 0.0
  %1667 = vmatprep.subr.mxu0 0.0
  %1668 = vmatpush1.msra.mxu0 %v50
  %1669 = vmatprep.subr.mxu0 0.0
  %1670 = vmatpush1.msra.mxu0 %v49
  %1671 = vmatprep.subr.mxu0 0.0
  %1672 = vmatpush1.msra.mxu0 %v48
  %1673 = vmatprep.subr.mxu0 0.0
  %1674 = vmatpush1.msra.mxu0 %v47
  %1675 = vmatprep.subr.mxu0 0.0
  %1676 = vmatpush2.msra.mxu0 0.0
  %1677 = vmatprep.subr.mxu0 0.0
  %1678 = vmatpush2.msra.mxu0 0.0
  %1679 = vmatprep.subr.mxu0 0.0
  %1680 = vmatpush2.msra.mxu0 0.0
  %1681 = vmatprep.subr.mxu0 0.0
  %1682 = vmatpush2.msra.mxu0 0.0
  %1683 = vmatprep.subr.mxu0 0.0
  %1684 = vmatpush2.msra.mxu0 0.0
  %1685 = vmatprep.subr.mxu0 0.0
  %1686 = vmatpush2.msra.mxu0 0.0
  %1687 = vmatprep.subr.mxu0 0.0
  %1688 = vmatpush2.msra.mxu0 0.0
  %1689 = vmatprep.subr.mxu0 0.0
  %1690 = vmatpush2.msra.mxu0 0.0
  %1691 = vmatprep.subr.mxu0 0.0
  %1692 = vmatpush2.msra.mxu0 0.0
  %1693 = vmatprep.subr.mxu0 0.0
  %1694 = vmatpush2.msra.mxu0 0.0
  %1695 = vmatprep.subr.mxu0 0.0
  %1696 = vmatpush2.msra.mxu0 0.0
  %1697 = vmatprep.subr.mxu0 0.0
  %1698 = vmatpush2.msra.mxu0 0.0
  %1699 = vmatprep.subr.mxu0 0.0
  %1700 = vmatpush2.msra.mxu0 0.0
  %1701 = vmatprep.subr.mxu0 0.0
  %1702 = vmatpush2.msra.mxu0 0.0
  %1703 = vmatprep.subr.mxu0 0.0
  %1704 = vmatpush2.msra.mxu0 0.0
  %1705 = vmatprep.subr.mxu0 0.0
  %1706 = vmatpush2.msra.mxu0 0.0
  %1707 = vmatprep.mubr.f32.mxu0 0.0
  %1708 = vmatmul.mubr.f32.gmra.mxu0 %v1641
  %v1709 = vpop.f32.mrf.mxu0
  %v1710 = vadd.f32 %v63, %v1709
  %v1711 = vpop.f32.mrf.mxu0
  %1712 = vdwg.mxu0
  %v1713 = vtanh.pop %v1710
  %v1714 = vmul.f32 %v1713, 2.0
  %1715 = vst [vmem:[%s10 + $0x28] sm:$0xff] %v1714
  %v1716 = vld [vmem:[#allocation2 + $0x30] sm:$0xff]
  %1717 = vmatprep.subr.mxu0 0.0
  %1718 = vmatpush1.msra.mxu0 0.0
  %1719 = vmatprep.subr.mxu0 0.0
  %1720 = vmatpush1.msra.mxu0 0.0
  %1721 = vmatprep.subr.mxu0 0.0
  %1722 = vmatpush1.msra.mxu0 0.0
  %1723 = vmatprep.subr.mxu0 0.0
  %1724 = vmatpush1.msra.mxu0 0.0
  %1725 = vmatprep.subr.mxu0 0.0
  %1726 = vmatpush1.msra.mxu0 0.0
  %1727 = vmatprep.subr.mxu0 0.0
  %1728 = vmatpush1.msra.mxu0 0.0
  %1729 = vmatprep.subr.mxu0 0.0
  %1730 = vmatpush1.msra.mxu0 0.0
  %1731 = vmatprep.subr.mxu0 0.0
  %1732 = vmatpush1.msra.mxu0 0.0
  %1733 = vmatprep.subr.mxu0 0.0
  %1734 = vmatpush1.msra.mxu0 0.0
  %1735 = vmatprep.subr.mxu0 0.0
  %1736 = vmatpush1.msra.mxu0 0.0
  %1737 = vmatprep.subr.mxu0 0.0
  %1738 = vmatpush1.msra.mxu0 0.0
  %1739 = vmatprep.subr.mxu0 0.0
  %1740 = vmatpush1.msra.mxu0 0.0
  %1741 = vmatprep.subr.mxu0 0.0
  %1742 = vmatpush1.msra.mxu0 %v42
  %1743 = vmatprep.subr.mxu0 0.0
  %1744 = vmatpush1.msra.mxu0 %v41
  %1745 = vmatprep.subr.mxu0 0.0
  %1746 = vmatpush1.msra.mxu0 %v40
  %1747 = vmatprep.subr.mxu0 0.0
  %1748 = vmatpush1.msra.mxu0 %v39
  %1749 = vmatprep.subr.mxu0 0.0
  %1750 = vmatpush2.msra.mxu0 0.0
  %1751 = vmatprep.subr.mxu0 0.0
  %1752 = vmatpush2.msra.mxu0 0.0
  %1753 = vmatprep.subr.mxu0 0.0
  %1754 = vmatpush2.msra.mxu0 0.0
  %1755 = vmatprep.subr.mxu0 0.0
  %1756 = vmatpush2.msra.mxu0 0.0
  %1757 = vmatprep.subr.mxu0 0.0
  %1758 = vmatpush2.msra.mxu0 0.0
  %1759 = vmatprep.subr.mxu0 0.0
  %1760 = vmatpush2.msra.mxu0 0.0
  %1761 = vmatprep.subr.mxu0 0.0
  %1762 = vmatpush2.msra.mxu0 0.0
  %1763 = vmatprep.subr.mxu0 0.0
  %1764 = vmatpush2.msra.mxu0 0.0
  %1765 = vmatprep.subr.mxu0 0.0
  %1766 = vmatpush2.msra.mxu0 0.0
  %1767 = vmatprep.subr.mxu0 0.0
  %1768 = vmatpush2.msra.mxu0 0.0
  %1769 = vmatprep.subr.mxu0 0.0
  %1770 = vmatpush2.msra.mxu0 0.0
  %1771 = vmatprep.subr.mxu0 0.0
  %1772 = vmatpush2.msra.mxu0 0.0
  %1773 = vmatprep.subr.mxu0 0.0
  %1774 = vmatpush2.msra.mxu0 0.0
  %1775 = vmatprep.subr.mxu0 0.0
  %1776 = vmatpush2.msra.mxu0 0.0
  %1777 = vmatprep.subr.mxu0 0.0
  %1778 = vmatpush2.msra.mxu0 0.0
  %1779 = vmatprep.subr.mxu0 0.0
  %1780 = vmatpush2.msra.mxu0 0.0
  %1781 = vmatprep.mubr.f32.mxu0 0.0
  %1782 = vmatmul.mubr.f32.gmra.mxu0 %v1567
  %v1783 = vpop.f32.mrf.mxu0
  %v1784 = vadd.f32 0.0, %v1783
  %v1785 = vpop.f32.mrf.mxu0
  %1786 = vdwg.mxu0
  %v1787 = vadd.f32 %v1716, %v1784
  %v1788 = vxor.u32 %v1787, 2147483648
  %v1789 = vmul.f32 %v1788, 1.442695
  %v1790 = vpow.pop %v1789
  %v1791 = vadd.f32 %v1790, 1.0
  %v1792 = vrcp.pop %v1791
  %v1793 = vmul.f32 1.0, %v1792
  %v1794 = vtanh.pop %v1787
  %v1795 = vmul.f32 %v1793, %v1557
  %1797 = vrot.lane.b32.xlu0 %v1794, 64
  %v1798 = vpop.permute.xlu0 %1797
  %v1800 = vmul.f32 %v1793, %v1798
  %1802 = vrot.lane.b32.xlu0 %v1800, 32
  %v1803 = vpop.permute.xlu0 %1802
  %v1805 = vadd.f32 %v1795, %v1803
  %v1806 = vtanh.pop %v1805
  %1808 = vrot.lane.b32.xlu0 %v1806, 64
  %v1809 = vpop.permute.xlu0 %1808
  %v1811 = vmul.f32 %v1793, %v1809
  %1813 = vrot.lane.b32.xlu0 %v1811, 32
  %v1814 = vpop.permute.xlu0 %1813
  %v1815 = vsel %vm221, %v1814, 0
  %1817 = vmatprep.subr.mxu0 0.0
  %1818 = vmatpush1.msra.mxu0 0.0
  %1819 = vmatprep.subr.mxu0 0.0
  %1820 = vmatpush1.msra.mxu0 0.0
  %1821 = vmatprep.subr.mxu0 0.0
  %1822 = vmatpush1.msra.mxu0 0.0
  %1823 = vmatprep.subr.mxu0 0.0
  %1824 = vmatpush1.msra.mxu0 0.0
  %1825 = vmatprep.subr.mxu0 0.0
  %1826 = vmatpush1.msra.mxu0 0.0
  %1827 = vmatprep.subr.mxu0 0.0
  %1828 = vmatpush1.msra.mxu0 0.0
  %1829 = vmatprep.subr.mxu0 0.0
  %1830 = vmatpush1.msra.mxu0 0.0
  %1831 = vmatprep.subr.mxu0 0.0
  %1832 = vmatpush1.msra.mxu0 0.0
  %1833 = vmatprep.subr.mxu0 0.0
  %1834 = vmatpush1.msra.mxu0 0.0
  %1835 = vmatprep.subr.mxu0 0.0
  %1836 = vmatpush1.msra.mxu0 0.0
  %1837 = vmatprep.subr.mxu0 0.0
  %1838 = vmatpush1.msra.mxu0 0.0
  %1839 = vmatprep.subr.mxu0 0.0
  %1840 = vmatpush1.msra.mxu0 0.0
  %1841 = vmatprep.subr.mxu0 0.0
  %1842 = vmatpush1.msra.mxu0 %v46
  %1843 = vmatprep.subr.mxu0 0.0
  %1844 = vmatpush1.msra.mxu0 %v45
  %1845 = vmatprep.subr.mxu0 0.0
  %1846 = vmatpush1.msra.mxu0 %v44
  %1847 = vmatprep.subr.mxu0 0.0
  %1848 = vmatpush1.msra.mxu0 %v43
  %1849 = vmatprep.subr.mxu0 0.0
  %1850 = vmatpush2.msra.mxu0 0.0
  %1851 = vmatprep.subr.mxu0 0.0
  %1852 = vmatpush2.msra.mxu0 0.0
  %1853 = vmatprep.subr.mxu0 0.0
  %1854 = vmatpush2.msra.mxu0 0.0
  %1855 = vmatprep.subr.mxu0 0.0
  %1856 = vmatpush2.msra.mxu0 0.0
  %1857 = vmatprep.subr.mxu0 0.0
  %1858 = vmatpush2.msra.mxu0 0.0
  %1859 = vmatprep.subr.mxu0 0.0
  %1860 = vmatpush2.msra.mxu0 0.0
  %1861 = vmatprep.subr.mxu0 0.0
  %1862 = vmatpush2.msra.mxu0 0.0
  %1863 = vmatprep.subr.mxu0 0.0
  %1864 = vmatpush2.msra.mxu0 0.0
  %1865 = vmatprep.subr.mxu0 0.0
  %1866 = vmatpush2.msra.mxu0 0.0
  %1867 = vmatprep.subr.mxu0 0.0
  %1868 = vmatpush2.msra.mxu0 0.0
  %1869 = vmatprep.subr.mxu0 0.0
  %1870 = vmatpush2.msra.mxu0 0.0
  %1871 = vmatprep.subr.mxu0 0.0
  %1872 = vmatpush2.msra.mxu0 0.0
  %1873 = vmatprep.subr.mxu0 0.0
  %1874 = vmatpush2.msra.mxu0 0.0
  %1875 = vmatprep.subr.mxu0 0.0
  %1876 = vmatpush2.msra.mxu0 0.0
  %1877 = vmatprep.subr.mxu0 0.0
  %1878 = vmatpush2.msra.mxu0 0.0
  %1879 = vmatprep.subr.mxu0 0.0
  %1880 = vmatpush2.msra.mxu0 0.0
  %1881 = vmatprep.mubr.f32.mxu0 0.0
  %1882 = vmatmul.mubr.f32.gmra.mxu0 %v1815
  %v1883 = vpop.f32.mrf.mxu0
  %v1884 = vadd.f32 %v56, %v1883
  %v1885 = vpop.f32.mrf.mxu0
  %1886 = vdwg.mxu0
  %v1887 = vmax.f32 %v1884, 0.0
  %v1889 = vsel %vm221, %v1887, 0
  %1891 = vmatprep.subr.mxu0 0.0
  %1892 = vmatpush1.msra.mxu0 0.0
  %1893 = vmatprep.subr.mxu0 0.0
  %1894 = vmatpush1.msra.mxu0 0.0
  %1895 = vmatprep.subr.mxu0 0.0
  %1896 = vmatpush1.msra.mxu0 0.0
  %1897 = vmatprep.subr.mxu0 0.0
  %1898 = vmatpush1.msra.mxu0 0.0
  %1899 = vmatprep.subr.mxu0 0.0
  %1900 = vmatpush1.msra.mxu0 0.0
  %1901 = vmatprep.subr.mxu0 0.0
  %1902 = vmatpush1.msra.mxu0 0.0
  %1903 = vmatprep.subr.mxu0 0.0
  %1904 = vmatpush1.msra.mxu0 0.0
  %1905 = vmatprep.subr.mxu0 0.0
  %1906 = vmatpush1.msra.mxu0 0.0
  %1907 = vmatprep.subr.mxu0 0.0
  %1908 = vmatpush1.msra.mxu0 0.0
  %1909 = vmatprep.subr.mxu0 0.0
  %1910 = vmatpush1.msra.mxu0 0.0
  %1911 = vmatprep.subr.mxu0 0.0
  %1912 = vmatpush1.msra.mxu0 0.0
  %1913 = vmatprep.subr.mxu0 0.0
  %1914 = vmatpush1.msra.mxu0 0.0
  %1915 = vmatprep.subr.mxu0 0.0
  %1916 = vmatpush1.msra.mxu0 %v50
  %1917 = vmatprep.subr.mxu0 0.0
  %1918 = vmatpush1.msra.mxu0 %v49
  %1919 = vmatprep.subr.mxu0 0.0
  %1920 = vmatpush1.msra.mxu0 %v48
  %1921 = vmatprep.subr.mxu0 0.0
  %1922 = vmatpush1.msra.mxu0 %v47
  %1923 = vmatprep.subr.mxu0 0.0
  %1924 = vmatpush2.msra.mxu0 0.0
  %1925 = vmatprep.subr.mxu0 0.0
  %1926 = vmatpush2.msra.mxu0 0.0
  %1927 = vmatprep.subr.mxu0 0.0
  %1928 = vmatpush2.msra.mxu0 0.0
  %1929 = vmatprep.subr.mxu0 0.0
  %1930 = vmatpush2.msra.mxu0 0.0
  %1931 = vmatprep.subr.mxu0 0.0
  %1932 = vmatpush2.msra.mxu0 0.0
  %1933 = vmatprep.subr.mxu0 0.0
  %1934 = vmatpush2.msra.mxu0 0.0
  %1935 = vmatprep.subr.mxu0 0.0
  %1936 = vmatpush2.msra.mxu0 0.0
  %1937 = vmatprep.subr.mxu0 0.0
  %1938 = vmatpush2.msra.mxu0 0.0
  %1939 = vmatprep.subr.mxu0 0.0
  %1940 = vmatpush2.msra.mxu0 0.0
  %1941 = vmatprep.subr.mxu0 0.0
  %1942 = vmatpush2.msra.mxu0 0.0
  %1943 = vmatprep.subr.mxu0 0.0
  %1944 = vmatpush2.msra.mxu0 0.0
  %1945 = vmatprep.subr.mxu0 0.0
  %1946 = vmatpush2.msra.mxu0 0.0
  %1947 = vmatprep.subr.mxu0 0.0
  %1948 = vmatpush2.msra.mxu0 0.0
  %1949 = vmatprep.subr.mxu0 0.0
  %1950 = vmatpush2.msra.mxu0 0.0
  %1951 = vmatprep.subr.mxu0 0.0
  %1952 = vmatpush2.msra.mxu0 0.0
  %1953 = vmatprep.subr.mxu0 0.0
  %1954 = vmatpush2.msra.mxu0 0.0
  %1955 = vmatprep.mubr.f32.mxu0 0.0
  %1956 = vmatmul.mubr.f32.gmra.mxu0 %v1889
  %v1957 = vpop.f32.mrf.mxu0
  %v1958 = vadd.f32 %v63, %v1957
  %v1959 = vpop.f32.mrf.mxu0
  %1960 = vdwg.mxu0
  %v1961 = vtanh.pop %v1958
  %v1962 = vmul.f32 %v1961, 2.0
  %1963 = vst [vmem:[%s10 + $0x30] sm:$0xff] %v1962
  %v1964 = vld [vmem:[#allocation2 + $0x38] sm:$0xff]
  %1965 = vmatprep.subr.mxu0 0.0
  %1966 = vmatpush1.msra.mxu0 0.0
  %1967 = vmatprep.subr.mxu0 0.0
  %1968 = vmatpush1.msra.mxu0 0.0
  %1969 = vmatprep.subr.mxu0 0.0
  %1970 = vmatpush1.msra.mxu0 0.0
  %1971 = vmatprep.subr.mxu0 0.0
  %1972 = vmatpush1.msra.mxu0 0.0
  %1973 = vmatprep.subr.mxu0 0.0
  %1974 = vmatpush1.msra.mxu0 0.0
  %1975 = vmatprep.subr.mxu0 0.0
  %1976 = vmatpush1.msra.mxu0 0.0
  %1977 = vmatprep.subr.mxu0 0.0
  %1978 = vmatpush1.msra.mxu0 0.0
  %1979 = vmatprep.subr.mxu0 0.0
  %1980 = vmatpush1.msra.mxu0 0.0
  %1981 = vmatprep.subr.mxu0 0.0
  %1982 = vmatpush1.msra.mxu0 0.0
  %1983 = vmatprep.subr.mxu0 0.0
  %1984 = vmatpush1.msra.mxu0 0.0
  %1985 = vmatprep.subr.mxu0 0.0
  %1986 = vmatpush1.msra.mxu0 0.0
  %1987 = vmatprep.subr.mxu0 0.0
  %1988 = vmatpush1.msra.mxu0 0.0
  %1989 = vmatprep.subr.mxu0 0.0
  %1990 = vmatpush1.msra.mxu0 %v42
  %1991 = vmatprep.subr.mxu0 0.0
  %1992 = vmatpush1.msra.mxu0 %v41
  %1993 = vmatprep.subr.mxu0 0.0
  %1994 = vmatpush1.msra.mxu0 %v40
  %1995 = vmatprep.subr.mxu0 0.0
  %1996 = vmatpush1.msra.mxu0 %v39
  %1997 = vmatprep.subr.mxu0 0.0
  %1998 = vmatpush2.msra.mxu0 0.0
  %1999 = vmatprep.subr.mxu0 0.0
  %2000 = vmatpush2.msra.mxu0 0.0
  %2001 = vmatprep.subr.mxu0 0.0
  %2002 = vmatpush2.msra.mxu0 0.0
  %2003 = vmatprep.subr.mxu0 0.0
  %2004 = vmatpush2.msra.mxu0 0.0
  %2005 = vmatprep.subr.mxu0 0.0
  %2006 = vmatpush2.msra.mxu0 0.0
  %2007 = vmatprep.subr.mxu0 0.0
  %2008 = vmatpush2.msra.mxu0 0.0
  %2009 = vmatprep.subr.mxu0 0.0
  %2010 = vmatpush2.msra.mxu0 0.0
  %2011 = vmatprep.subr.mxu0 0.0
  %2012 = vmatpush2.msra.mxu0 0.0
  %2013 = vmatprep.subr.mxu0 0.0
  %2014 = vmatpush2.msra.mxu0 0.0
  %2015 = vmatprep.subr.mxu0 0.0
  %2016 = vmatpush2.msra.mxu0 0.0
  %2017 = vmatprep.subr.mxu0 0.0
  %2018 = vmatpush2.msra.mxu0 0.0
  %2019 = vmatprep.subr.mxu0 0.0
  %2020 = vmatpush2.msra.mxu0 0.0
  %2021 = vmatprep.subr.mxu0 0.0
  %2022 = vmatpush2.msra.mxu0 0.0
  %2023 = vmatprep.subr.mxu0 0.0
  %2024 = vmatpush2.msra.mxu0 0.0
  %2025 = vmatprep.subr.mxu0 0.0
  %2026 = vmatpush2.msra.mxu0 0.0
  %2027 = vmatprep.subr.mxu0 0.0
  %2028 = vmatpush2.msra.mxu0 0.0
  %2029 = vmatprep.mubr.f32.mxu0 0.0
  %2030 = vmatmul.mubr.f32.gmra.mxu0 %v1815
  %v2031 = vpop.f32.mrf.mxu0
  %v2032 = vadd.f32 0.0, %v2031
  %v2033 = vpop.f32.mrf.mxu0
  %2034 = vdwg.mxu0
  %v2035 = vadd.f32 %v1964, %v2032
  %v2036 = vxor.u32 %v2035, 2147483648
  %v2037 = vmul.f32 %v2036, 1.442695
  %v2038 = vpow.pop %v2037
  %v2039 = vadd.f32 %v2038, 1.0
  %v2040 = vrcp.pop %v2039
  %v2041 = vmul.f32 1.0, %v2040
  %v2042 = vtanh.pop %v2035
  %v2043 = vmul.f32 %v2041, %v1805
  %2045 = vrot.lane.b32.xlu0 %v2042, 64
  %v2046 = vpop.permute.xlu0 %2045
  %v2048 = vmul.f32 %v2041, %v2046
  %2050 = vrot.lane.b32.xlu0 %v2048, 32
  %v2051 = vpop.permute.xlu0 %2050
  %v2053 = vadd.f32 %v2043, %v2051
  %v2054 = vtanh.pop %v2053
  %2056 = vrot.lane.b32.xlu0 %v2054, 64
  %v2057 = vpop.permute.xlu0 %2056
  %v2059 = vmul.f32 %v2041, %v2057
  %2061 = vrot.lane.b32.xlu0 %v2059, 32
  %v2062 = vpop.permute.xlu0 %2061
  %v2063 = vsel %vm221, %v2062, 0
  %2065 = vmatprep.subr.mxu0 0.0
  %2066 = vmatpush1.msra.mxu0 0.0
  %2067 = vmatprep.subr.mxu0 0.0
  %2068 = vmatpush1.msra.mxu0 0.0
  %2069 = vmatprep.subr.mxu0 0.0
  %2070 = vmatpush1.msra.mxu0 0.0
  %2071 = vmatprep.subr.mxu0 0.0
  %2072 = vmatpush1.msra.mxu0 0.0
  %2073 = vmatprep.subr.mxu0 0.0
  %2074 = vmatpush1.msra.mxu0 0.0
  %2075 = vmatprep.subr.mxu0 0.0
  %2076 = vmatpush1.msra.mxu0 0.0
  %2077 = vmatprep.subr.mxu0 0.0
  %2078 = vmatpush1.msra.mxu0 0.0
  %2079 = vmatprep.subr.mxu0 0.0
  %2080 = vmatpush1.msra.mxu0 0.0
  %2081 = vmatprep.subr.mxu0 0.0
  %2082 = vmatpush1.msra.mxu0 0.0
  %2083 = vmatprep.subr.mxu0 0.0
  %2084 = vmatpush1.msra.mxu0 0.0
  %2085 = vmatprep.subr.mxu0 0.0
  %2086 = vmatpush1.msra.mxu0 0.0
  %2087 = vmatprep.subr.mxu0 0.0
  %2088 = vmatpush1.msra.mxu0 0.0
  %2089 = vmatprep.subr.mxu0 0.0
  %2090 = vmatpush1.msra.mxu0 %v46
  %2091 = vmatprep.subr.mxu0 0.0
  %2092 = vmatpush1.msra.mxu0 %v45
  %2093 = vmatprep.subr.mxu0 0.0
  %2094 = vmatpush1.msra.mxu0 %v44
  %2095 = vmatprep.subr.mxu0 0.0
  %2096 = vmatpush1.msra.mxu0 %v43
  %2097 = vmatprep.subr.mxu0 0.0
  %2098 = vmatpush2.msra.mxu0 0.0
  %2099 = vmatprep.subr.mxu0 0.0
  %2100 = vmatpush2.msra.mxu0 0.0
  %2101 = vmatprep.subr.mxu0 0.0
  %2102 = vmatpush2.msra.mxu0 0.0
  %2103 = vmatprep.subr.mxu0 0.0
  %2104 = vmatpush2.msra.mxu0 0.0
  %2105 = vmatprep.subr.mxu0 0.0
  %2106 = vmatpush2.msra.mxu0 0.0
  %2107 = vmatprep.subr.mxu0 0.0
  %2108 = vmatpush2.msra.mxu0 0.0
  %2109 = vmatprep.subr.mxu0 0.0
  %2110 = vmatpush2.msra.mxu0 0.0
  %2111 = vmatprep.subr.mxu0 0.0
  %2112 = vmatpush2.msra.mxu0 0.0
  %2113 = vmatprep.subr.mxu0 0.0
  %2114 = vmatpush2.msra.mxu0 0.0
  %2115 = vmatprep.subr.mxu0 0.0
  %2116 = vmatpush2.msra.mxu0 0.0
  %2117 = vmatprep.subr.mxu0 0.0
  %2118 = vmatpush2.msra.mxu0 0.0
  %2119 = vmatprep.subr.mxu0 0.0
  %2120 = vmatpush2.msra.mxu0 0.0
  %2121 = vmatprep.subr.mxu0 0.0
  %2122 = vmatpush2.msra.mxu0 0.0
  %2123 = vmatprep.subr.mxu0 0.0
  %2124 = vmatpush2.msra.mxu0 0.0
  %2125 = vmatprep.subr.mxu0 0.0
  %2126 = vmatpush2.msra.mxu0 0.0
  %2127 = vmatprep.subr.mxu0 0.0
  %2128 = vmatpush2.msra.mxu0 0.0
  %2129 = vmatprep.mubr.f32.mxu0 0.0
  %2130 = vmatmul.mubr.f32.gmra.mxu0 %v2063
  %v2131 = vpop.f32.mrf.mxu0
  %v2132 = vadd.f32 %v56, %v2131
  %v2133 = vpop.f32.mrf.mxu0
  %2134 = vdwg.mxu0
  %v2135 = vmax.f32 %v2132, 0.0
  %v2137 = vsel %vm221, %v2135, 0
  %2139 = vmatprep.subr.mxu0 0.0
  %2140 = vmatpush1.msra.mxu0 0.0
  %2141 = vmatprep.subr.mxu0 0.0
  %2142 = vmatpush1.msra.mxu0 0.0
  %2143 = vmatprep.subr.mxu0 0.0
  %2144 = vmatpush1.msra.mxu0 0.0
  %2145 = vmatprep.subr.mxu0 0.0
  %2146 = vmatpush1.msra.mxu0 0.0
  %2147 = vmatprep.subr.mxu0 0.0
  %2148 = vmatpush1.msra.mxu0 0.0
  %2149 = vmatprep.subr.mxu0 0.0
  %2150 = vmatpush1.msra.mxu0 0.0
  %2151 = vmatprep.subr.mxu0 0.0
  %2152 = vmatpush1.msra.mxu0 0.0
  %2153 = vmatprep.subr.mxu0 0.0
  %2154 = vmatpush1.msra.mxu0 0.0
  %2155 = vmatprep.subr.mxu0 0.0
  %2156 = vmatpush1.msra.mxu0 0.0
  %2157 = vmatprep.subr.mxu0 0.0
  %2158 = vmatpush1.msra.mxu0 0.0
  %2159 = vmatprep.subr.mxu0 0.0
  %2160 = vmatpush1.msra.mxu0 0.0
  %2161 = vmatprep.subr.mxu0 0.0
  %2162 = vmatpush1.msra.mxu0 0.0
  %2163 = vmatprep.subr.mxu0 0.0
  %2164 = vmatpush1.msra.mxu0 %v50
  %2165 = vmatprep.subr.mxu0 0.0
  %2166 = vmatpush1.msra.mxu0 %v49
  %2167 = vmatprep.subr.mxu0 0.0
  %2168 = vmatpush1.msra.mxu0 %v48
  %2169 = vmatprep.subr.mxu0 0.0
  %2170 = vmatpush1.msra.mxu0 %v47
  %2171 = vmatprep.subr.mxu0 0.0
  %2172 = vmatpush2.msra.mxu0 0.0
  %2173 = vmatprep.subr.mxu0 0.0
  %2174 = vmatpush2.msra.mxu0 0.0
  %2175 = vmatprep.subr.mxu0 0.0
  %2176 = vmatpush2.msra.mxu0 0.0
  %2177 = vmatprep.subr.mxu0 0.0
  %2178 = vmatpush2.msra.mxu0 0.0
  %2179 = vmatprep.subr.mxu0 0.0
  %2180 = vmatpush2.msra.mxu0 0.0
  %2181 = vmatprep.subr.mxu0 0.0
  %2182 = vmatpush2.msra.mxu0 0.0
  %2183 = vmatprep.subr.mxu0 0.0
  %2184 = vmatpush2.msra.mxu0 0.0
  %2185 = vmatprep.subr.mxu0 0.0
  %2186 = vmatpush2.msra.mxu0 0.0
  %2187 = vmatprep.subr.mxu0 0.0
  %2188 = vmatpush2.msra.mxu0 0.0
  %2189 = vmatprep.subr.mxu0 0.0
  %2190 = vmatpush2.msra.mxu0 0.0
  %2191 = vmatprep.subr.mxu0 0.0
  %2192 = vmatpush2.msra.mxu0 0.0
  %2193 = vmatprep.subr.mxu0 0.0
  %2194 = vmatpush2.msra.mxu0 0.0
  %2195 = vmatprep.subr.mxu0 0.0
  %2196 = vmatpush2.msra.mxu0 0.0
  %2197 = vmatprep.subr.mxu0 0.0
  %2198 = vmatpush2.msra.mxu0 0.0
  %2199 = vmatprep.subr.mxu0 0.0
  %2200 = vmatpush2.msra.mxu0 0.0
  %2201 = vmatprep.subr.mxu0 0.0
  %2202 = vmatpush2.msra.mxu0 0.0
  %2203 = vmatprep.mubr.f32.mxu0 0.0
  %2204 = vmatmul.mubr.f32.gmra.mxu0 %v2137
  %v2205 = vpop.f32.mrf.mxu0
  %v2206 = vadd.f32 %v63, %v2205
  %v2207 = vpop.f32.mrf.mxu0
  %2208 = vdwg.mxu0
  %v2209 = vtanh.pop %v2206
  %v2210 = vmul.f32 %v2209, 2.0
  %2211 = vst [vmem:[%s10 + $0x38] sm:$0xff] %v2210
  %2213 = vst.msk [vmem:[%s11] sm:$0xff] %vm221, %v2062
  %2215 = vrot.lane.b32.xlu0 %v2053, 96
  %v2216 = vpop.permute.xlu0 %2215
  %2218 = vst.msk [vmem:[%s12] sm:$0xff] %vm221, %v2216
  // Predicated region
  $region42: #{actor_forward.1} parent=0 // pred_check
    _
  $region43: #{actor_forward.1} parent=0 // pred_check_branch
    %2220 = sbr.rel (0) target = $region45
  $region44: #{actor_forward.1} parent=0 // pred_region
    _
  $region45: #{actor_forward.1} parent=0 // pred_fallthru
    _
  // Predicated region
  $region46: #{actor_forward.1} parent=0 // pred_check
    _
  $region47: #{actor_forward.1} parent=0 // pred_check_branch
    %2222 = sbr.rel (0) target = $region49
  $region48: #{actor_forward.1} parent=0 // pred_region
    _
  $region49: #{actor_forward.1} parent=0 // pred_fallthru
    _
  // Predicated region
  $region50: #{actor_forward.1} parent=0 // pred_check
    _
  $region51: #{actor_forward.1} parent=0 // pred_check_branch
    %2224 = sbr.rel (0) target = $region53
  $region52: #{actor_forward.1} parent=0 // pred_region
    _
  $region53: #{actor_forward.1} parent=0 // pred_fallthru
    _
  // Predicated region
  $region54: #{actor_forward.1} parent=0 // pred_check
    _
  $region55: #{actor_forward.1} parent=0 // pred_check_branch
    %2226 = sbr.rel (0) target = $region57
  $region56: #{actor_forward.1} parent=0 // pred_region
    _
  $region57: #{actor_forward.1} parent=0 // pred_fallthru
    _
  // Predicated region
  $region58: #{actor_forward.1} parent=0 // pred_check
    _
  $region59: #{actor_forward.1} parent=0 // pred_check_branch
    %2228 = sbr.rel (0) target = $region61
  $region60: #{actor_forward.1} parent=0 // pred_region
    _
  $region61: #{actor_forward.1} parent=0 // pred_fallthru
    _
  // Predicated region
  $region62: #{actor_forward.1} parent=0 // pred_check
    _
  $region63: #{actor_forward.1} parent=0 // pred_check_branch
    %2230 = sbr.rel (0) target = $region65
  $region64: #{actor_forward.1} parent=0 // pred_region
    _
  $region65: #{actor_forward.1} parent=0 // pred_fallthru
    _

</llo_original>
